<compile_context>
chip_gen: v5e
topology: v5e:2x2
jax: 0.10.0
libtpu: 0.0.40
codegen_flags: <defaults>
</compile_context>

<pallas_src>
import math

import jax
import jax.numpy as jnp
from jax.experimental import pallas as pl
from jax.experimental.pallas import tpu as pltpu

# ---- config (small, BERT-like) -------------------------------------------
BATCH = 2
SEQ = 16
HIDDEN = 64
NUM_HEADS = 4
HEAD_DIM = HIDDEN // NUM_HEADS
INTERMEDIATE = 256
LN_EPS = 1e-12


# ---- fused BertLayer kernel (single grid step, batch stacked on sublanes) --
def bert_layer_kernel(
    x_ref,        # (B*S, H)        f32   hidden states (batch stacked on rows)
    bias_ref,     # (NH*B*S, B*S)   f32   additive score bias (key + batch-block mask)
    hmask_ref,    # (NH*B*S, H)     f32   0/1 block-diagonal head selector
    wqkvo_ref,    # (4H, H)         bf16  [wq*scale; wk; wv; wo] row-stacked
    w1_ref,       # (H, I)          bf16
    w2_ref,       # (I, H)          bf16
    vecs_ref,     # (9, H)          f32   [bq*scale, bk, bv, bo, g1, be1, b2, g2, be2]
    b1_ref,       # (1, I)          f32
    out_ref,      # (B*S, H)
):
    B, S, H, NH = BATCH, SEQ, HIDDEN, NUM_HEADS
    BS = B * S

    x = x_ref[...].astype(jnp.float32)              # (BS, H)
    x_bf = x.astype(jnp.bfloat16)

    vec = vecs_ref[...]                              # (9, H) f32
    bq, bk, bv, bo = vec[0:1], vec[1:2], vec[2:3], vec[3:4]
    g1, be1 = vec[4:5], vec[5:6]
    b2, g2, be2 = vec[6:7], vec[7:8], vec[8:9]

    w = wqkvo_ref[...]                               # (4H, H) bf16

    def mm(a_bf16, w_bf16):
        return jnp.dot(a_bf16, w_bf16, preferred_element_type=jnp.float32)

    def layer_norm(t, g, b):
        # single-pass: var = E[x^2] - mean^2 (halves the cross-lane reduces)
        mu = jnp.mean(t, axis=-1, keepdims=True)
        mu2 = jnp.mean(t * t, axis=-1, keepdims=True)
        var = mu2 - mu * mu
        return (t - mu) * jax.lax.rsqrt(var + LN_EPS) * g + b

    # ---- BertSDPA attention: all heads & batches in one score/softmax pass --
    # (1/sqrt(head_dim) already folded into wq / bq at pack time)
    q = mm(x_bf, w[0 * H:1 * H]) + bq                # (BS, H) f32
    k = mm(x_bf, w[1 * H:2 * H]) + bk
    v = mm(x_bf, w[2 * H:3 * H]) + bv

    hmask = hmask_ref[...]                           # (NH*BS, H) f32 0/1
    # replicate q for each head along sublanes (rows ordered (head, batch, seq))
    q_stack = jnp.broadcast_to(q[None], (NH, BS, H)).reshape(NH * BS, H) * hmask

    # scores for all heads/batches with one (NH*BS, H) x (BS, H)^T matmul
    s = jax.lax.dot_general(
        q_stack.astype(jnp.bfloat16), k.astype(jnp.bfloat16),
        (((1,), (1,)), ((), ())), preferred_element_type=jnp.float32,
    )                                                # (NH*BS, BS)
    s = s + bias_ref[...]                            # key mask + cross-batch block mask
    s = s - jnp.max(s, axis=-1, keepdims=True)
    p = jnp.exp(s)
    p = p * pl.reciprocal(jnp.sum(p, axis=-1, keepdims=True), approx=True)

    # context for all heads with one matmul, fold head row-blocks back into H
    c = mm(p.astype(jnp.bfloat16), v.astype(jnp.bfloat16))   # (NH*BS, H)
    c = c * hmask
    ctx = c[0:BS]
    for h in range(1, NH):                           # sublane-aligned slices + adds
        ctx = ctx + c[h * BS:(h + 1) * BS]           # (BS, H)

    attn = mm(ctx.astype(jnp.bfloat16), w[3 * H:4 * H]) + bo

    # dropout1 is identity in eval mode
    h1 = layer_norm(x + attn, g1, be1)

    # ---- FusedMLP: fc1 -> gelu(tanh approx) -> fc2 ----
    inter = jax.nn.gelu(mm(h1.astype(jnp.bfloat16), w1_ref[...]) + b1_ref[...],
                        approximate=True)
    mlp = mm(inter.astype(jnp.bfloat16), w2_ref[...]) + b2

    # dropout2 is identity in eval mode
    out_ref[...] = layer_norm(h1 + mlp, g2, be2).astype(out_ref.dtype)


# ---- one-time parameter packing (weights bf16, scale folded, masks built) --
def pack_params(params):
    H, D, NH, B, S = HIDDEN, HEAD_DIM, NUM_HEADS, BATCH, SEQ
    BS = B * S
    scale = 1.0 / math.sqrt(D)

    wqkvo = jnp.concatenate(
        [params["wq"] * scale, params["wk"], params["wv"], params["wo"]],
        axis=0).astype(jnp.bfloat16)                          # (4H, H)
    vecs = jnp.concatenate(
        [params["bq"] * scale, params["bk"], params["bv"], params["bo"],
         params["g1"], params["be1"], params["b2"], params["g2"], params["be2"]],
        axis=0).astype(jnp.float32)                           # (9, H)

    # constant block-diagonal head selector, rows ordered (head, batch, seq)
    row_h = jnp.arange(NH * BS, dtype=jnp.int32) // BS
    col_h = jnp.arange(H, dtype=jnp.int32) // D
    head_mask = (row_h[:, None] == col_h[None, :]).astype(jnp.float32)

    return {
        "wqkvo": wqkvo,
        "w1": params["w1"].astype(jnp.bfloat16),
        "w2": params["w2"].astype(jnp.bfloat16),
        "vecs": vecs,
        "b1": params["b1"].astype(jnp.float32),
        "head_mask": head_mask,
    }


# ---- wrapper ---------------------------------------------------------------
@jax.jit
def bert_layer_pallas(x, mask, packed):
    B, S, H = x.shape
    BS = B * S
    NH = NUM_HEADS
    I = packed["b1"].shape[1]

    x2 = x.reshape(BS, H)

    # full additive score bias: key mask (per key's batch) + cross-batch block
    # mask; rows ordered (head, batch, seq).  Built once per call by XLA.
    key_bias = mask.reshape(1, BS).astype(jnp.float32)
    row_b = (jnp.arange(NH * BS, dtype=jnp.int32) // S) % B
    col_b = jnp.arange(BS, dtype=jnp.int32) // S
    attn_bias = key_bias + jnp.where(row_b[:, None] == col_b[None, :], 0.0, -1e9)

    inputs = [x2, attn_bias, packed["head_mask"],
              packed["wqkvo"], packed["w1"], packed["w2"],
              packed["vecs"], packed["b1"]]

    in_specs = [pl.BlockSpec(a.shape, lambda i: (0, 0)) for a in inputs]
    out_spec = pl.BlockSpec((BS, H), lambda i: (0, 0))

    flops = (4 * 2 * BS * H * H            # q, k, v, out projections
             + 2 * (NH * BS) * H * BS      # scores
             + 2 * (NH * BS) * BS * H      # context
             + 2 * BS * H * I              # fc1
             + 2 * BS * I * H)             # fc2
    transc = NH * BS * BS + BS * I + NH * BS + 2 * BS
    nbytes = sum(int(a.size) * a.dtype.itemsize for a in inputs) + BS * H * 4
    cost = pl.CostEstimate(flops=flops, transcendentals=transc,
                           bytes_accessed=int(nbytes))

    # NOTE: at real BERT dims (H>=768, S=512) this all-resident design must be
    # re-tiled with a query-tile grid axis and an explicit vmem_limit_bytes;
    # at these toy shapes total VMEM footprint is ~0.2 MiB.
    out2 = pl.pallas_call(
        bert_layer_kernel,
        out_shape=jax.ShapeDtypeStruct((BS, H), x.dtype),
        grid=(1,),
        in_specs=in_specs,
        out_specs=out_spec,
        compiler_params=pltpu.CompilerParams(
            dimension_semantics=("arbitrary",)),
        cost_estimate=cost,
    )(*inputs)

    return out2.reshape(B, S, H)


# ---- pure-JAX reference for verification -----------------------------------
def bert_layer_ref(x, mask, p):
    x = x.astype(jnp.float32)
    mask = mask.astype(jnp.float32)  # (B, 1, S)

    def dense(t, w, b):
        return t @ w + b

    def layer_norm(t, g, be):
        mu = jnp.mean(t, axis=-1, keepdims=True)
        var = jnp.mean((t - mu) ** 2, axis=-1, keepdims=True)
        return (t - mu) * jax.lax.rsqrt(var + LN_EPS) * g + be

    B, S, H = x.shape
    q = dense(x, p["wq"], p["bq"]).reshape(B, S, NUM_HEADS, HEAD_DIM).transpose(0, 2, 1, 3)
    k = dense(x, p["wk"], p["bk"]).reshape(B, S, NUM_HEADS, HEAD_DIM).transpose(0, 2, 1, 3)
    v = dense(x, p["wv"], p["bv"]).reshape(B, S, NUM_HEADS, HEAD_DIM).transpose(0, 2, 1, 3)
    s = jnp.einsum("bhqd,bhkd->bhqk", q, k) / math.sqrt(HEAD_DIM)
    s = s + mask[:, None, :, :]
    a = jax.nn.softmax(s, axis=-1)
    ctx = jnp.einsum("bhqk,bhkd->bhqd", a, v).transpose(0, 2, 1, 3).reshape(B, S, H)
    attn_out = dense(ctx, p["wo"], p["bo"])
    h1 = layer_norm(x + attn_out, p["g1"], p["be1"])
    inter = jax.nn.gelu(dense(h1, p["w1"], p["b1"]), approximate=True)
    mlp_out = dense(inter, p["w2"], p["b2"])
    return layer_norm(h1 + mlp_out, p["g2"], p["be2"])


# ---- deterministic parameter init ------------------------------------------
def init_params(key):
    ks = jax.random.split(key, 8)
    std = 0.02

    def w(k, shape):
        return jax.random.normal(k, shape, jnp.float32) * std

    return {
        "wq": w(ks[0], (HIDDEN, HIDDEN)), "bq": jnp.zeros((1, HIDDEN), jnp.float32),
        "wk": w(ks[1], (HIDDEN, HIDDEN)), "bk": jnp.zeros((1, HIDDEN), jnp.float32),
        "wv": w(ks[2], (HIDDEN, HIDDEN)), "bv": jnp.zeros((1, HIDDEN), jnp.float32),
        "wo": w(ks[3], (HIDDEN, HIDDEN)), "bo": jnp.zeros((1, HIDDEN), jnp.float32),
        "g1": jnp.ones((1, HIDDEN), jnp.float32), "be1": jnp.zeros((1, HIDDEN), jnp.float32),
        "w1": w(ks[4], (HIDDEN, INTERMEDIATE)), "b1": jnp.full((1, INTERMEDIATE), 0.01, jnp.float32),
        "w2": w(ks[5], (INTERMEDIATE, HIDDEN)), "b2": jnp.full((1, HIDDEN), 0.01, jnp.float32),
        "g2": jnp.ones((1, HIDDEN), jnp.float32), "be2": jnp.zeros((1, HIDDEN), jnp.float32),
    }


if __name__ == "__main__":
    key = jax.random.PRNGKey(0)
    k_x, k_p = jax.random.split(key)

    x = jax.random.normal(k_x, (BATCH, SEQ, HIDDEN), jnp.float32)

    # additive attention mask (B, 1, S): last 3 keys of batch 1 are masked out
    mask = jnp.zeros((BATCH, 1, SEQ), jnp.float32)
    mask = mask.at[1, 0, SEQ - 3:].set(-1e9)

    params = init_params(k_p)
    packed = pack_params(params)          # one-time parameter preparation

    out = bert_layer_pallas(x, mask, packed)
    out = jax.block_until_ready(out)

    ref = bert_layer_ref(x, mask, params)
    assert out.shape == (BATCH, SEQ, HIDDEN)
    # bf16 MXU operands + approx reciprocal + single-pass LN vs f32 reference:
    # ~1e-3 error; 1e-2 tolerance leaves margin while still catching real bugs.
    if not jnp.allclose(out, ref, rtol=1e-2, atol=1e-2):
        raise AssertionError("Pallas output does not match JAX reference")

    print("KERNEL_OK")
</pallas_src>

<mosaic_0001>
module attributes {stable_mosaic.version = 11 : i64} {
  func.func @bert_layer_kernel(%arg0: i32, %arg1: memref<32x64xf32, #tpu.memory_space<vmem>>, %arg2: memref<128x32xf32, #tpu.memory_space<vmem>>, %arg3: memref<128x64xf32, #tpu.memory_space<vmem>>, %arg4: memref<256x64xbf16, #tpu.memory_space<vmem>>, %arg5: memref<64x256xbf16, #tpu.memory_space<vmem>>, %arg6: memref<256x64xbf16, #tpu.memory_space<vmem>>, %arg7: memref<9x64xf32, #tpu.memory_space<vmem>>, %arg8: memref<1x256xf32, #tpu.memory_space<vmem>>, %arg9: memref<32x64xf32, #tpu.memory_space<vmem>>) attributes {dimension_semantics = [#tpu.dimension_semantics<arbitrary>], iteration_bounds = array<i64: 1>, scalar_prefetch = 0 : i64, scratch_operands = 0 : i64, tpu.core_type = #tpu.core_type<tc>, window_params = [{pipeline_mode = #tpu.pipeline_mode<synchronous>, transform_indices = @transform_0, window_bounds = array<i64: 32, 64>}, {pipeline_mode = #tpu.pipeline_mode<synchronous>, transform_indices = @transform_1, window_bounds = array<i64: 128, 32>}, {pipeline_mode = #tpu.pipeline_mode<synchronous>, transform_indices = @transform_2, window_bounds = array<i64: 128, 64>}, {pipeline_mode = #tpu.pipeline_mode<synchronous>, transform_indices = @transform_3, window_bounds = array<i64: 256, 64>}, {pipeline_mode = #tpu.pipeline_mode<synchronous>, transform_indices = @transform_4, window_bounds = array<i64: 64, 256>}, {pipeline_mode = #tpu.pipeline_mode<synchronous>, transform_indices = @transform_5, window_bounds = array<i64: 256, 64>}, {pipeline_mode = #tpu.pipeline_mode<synchronous>, transform_indices = @transform_6, window_bounds = array<i64: 9, 64>}, {pipeline_mode = #tpu.pipeline_mode<synchronous>, transform_indices = @transform_7, window_bounds = array<i64: 1, 256>}, {pipeline_mode = #tpu.pipeline_mode<synchronous>, transform_indices = @transform_8, window_bounds = array<i64: 32, 64>}]} {
    %c0 = arith.constant 0 : index
    %c0_0 = arith.constant 0 : index
    %0 = vector.load %arg1[%c0, %c0_0] : memref<32x64xf32, #tpu.memory_space<vmem>>, vector<32x64xf32>
    %1 = arith.truncf %0 : vector<32x64xf32> to vector<32x64xbf16>
    %c0_1 = arith.constant 0 : index
    %c0_2 = arith.constant 0 : index
    %2 = vector.load %arg7[%c0_1, %c0_2] : memref<9x64xf32, #tpu.memory_space<vmem>>, vector<9x64xf32>
    %3 = vector.extract_strided_slice %2 {offsets = [0, 0], sizes = [1, 64], strides = [1, 1]} : vector<9x64xf32> to vector<1x64xf32>
    %4 = vector.extract_strided_slice %2 {offsets = [1, 0], sizes = [1, 64], strides = [1, 1]} : vector<9x64xf32> to vector<1x64xf32>
    %5 = vector.extract_strided_slice %2 {offsets = [2, 0], sizes = [1, 64], strides = [1, 1]} : vector<9x64xf32> to vector<1x64xf32>
    %6 = vector.extract_strided_slice %2 {offsets = [3, 0], sizes = [1, 64], strides = [1, 1]} : vector<9x64xf32> to vector<1x64xf32>
    %7 = vector.extract_strided_slice %2 {offsets = [4, 0], sizes = [1, 64], strides = [1, 1]} : vector<9x64xf32> to vector<1x64xf32>
    %8 = vector.extract_strided_slice %2 {offsets = [5, 0], sizes = [1, 64], strides = [1, 1]} : vector<9x64xf32> to vector<1x64xf32>
    %9 = vector.extract_strided_slice %2 {offsets = [6, 0], sizes = [1, 64], strides = [1, 1]} : vector<9x64xf32> to vector<1x64xf32>
    %10 = vector.extract_strided_slice %2 {offsets = [7, 0], sizes = [1, 64], strides = [1, 1]} : vector<9x64xf32> to vector<1x64xf32>
    %11 = vector.extract_strided_slice %2 {offsets = [8, 0], sizes = [1, 64], strides = [1, 1]} : vector<9x64xf32> to vector<1x64xf32>
    %c0_3 = arith.constant 0 : index
    %c0_4 = arith.constant 0 : index
    %12 = vector.load %arg4[%c0_3, %c0_4] : memref<256x64xbf16, #tpu.memory_space<vmem>>, vector<256x64xbf16>
    %13 = vector.extract_strided_slice %12 {offsets = [0, 0], sizes = [64, 64], strides = [1, 1]} : vector<256x64xbf16> to vector<64x64xbf16>
    %cst = arith.constant dense<0.000000e+00> : vector<32x64xf32>
    %14 = tpu.matmul %1, %13, %cst {dimension_numbers = #tpu.dot_dimension_numbers<[1], [0], [0], [1], [0, 0, 1, 1], [], []>} : vector<32x64xbf16>, vector<64x64xbf16>, vector<32x64xf32> -> vector<32x64xf32>
    %15 = vector.broadcast %3 : vector<1x64xf32> to vector<32x64xf32>
    %16 = arith.addf %14, %15 : vector<32x64xf32>
    %17 = vector.extract_strided_slice %12 {offsets = [64, 0], sizes = [64, 64], strides = [1, 1]} : vector<256x64xbf16> to vector<64x64xbf16>
    %cst_5 = arith.constant dense<0.000000e+00> : vector<32x64xf32>
    %18 = tpu.matmul %1, %17, %cst_5 {dimension_numbers = #tpu.dot_dimension_numbers<[1], [0], [0], [1], [0, 0, 1, 1], [], []>} : vector<32x64xbf16>, vector<64x64xbf16>, vector<32x64xf32> -> vector<32x64xf32>
    %19 = vector.broadcast %4 : vector<1x64xf32> to vector<32x64xf32>
    %20 = arith.addf %18, %19 : vector<32x64xf32>
    %21 = vector.extract_strided_slice %12 {offsets = [128, 0], sizes = [64, 64], strides = [1, 1]} : vector<256x64xbf16> to vector<64x64xbf16>
    %cst_6 = arith.constant dense<0.000000e+00> : vector<32x64xf32>
    %22 = tpu.matmul %1, %21, %cst_6 {dimension_numbers = #tpu.dot_dimension_numbers<[1], [0], [0], [1], [0, 0, 1, 1], [], []>} : vector<32x64xbf16>, vector<64x64xbf16>, vector<32x64xf32> -> vector<32x64xf32>
    %23 = vector.broadcast %5 : vector<1x64xf32> to vector<32x64xf32>
    %24 = arith.addf %22, %23 : vector<32x64xf32>
    %c0_7 = arith.constant 0 : index
    %c0_8 = arith.constant 0 : index
    %25 = vector.load %arg3[%c0_7, %c0_8] : memref<128x64xf32, #tpu.memory_space<vmem>>, vector<128x64xf32>
    %26 = vector.shape_cast %16 : vector<32x64xf32> to vector<1x32x64xf32>
    %27 = vector.shape_cast %26 : vector<1x32x64xf32> to vector<1x32x64xf32>
    %28 = vector.broadcast %27 : vector<1x32x64xf32> to vector<4x32x64xf32>
    %29 = vector.shape_cast %28 : vector<4x32x64xf32> to vector<128x64xf32>
    %30 = arith.mulf %29, %25 : vector<128x64xf32>
    %31 = arith.truncf %30 : vector<128x64xf32> to vector<128x64xbf16>
    %32 = arith.truncf %20 : vector<32x64xf32> to vector<32x64xbf16>
    %cst_9 = arith.constant dense<0.000000e+00> : vector<128x32xf32>
    %33 = tpu.matmul %31, %32, %cst_9 {dimension_numbers = #tpu.dot_dimension_numbers<[1], [1], [0], [0], [0, 0, 1, 0], [], []>} : vector<128x64xbf16>, vector<32x64xbf16>, vector<128x32xf32> -> vector<128x32xf32>
    %c0_10 = arith.constant 0 : index
    %c0_11 = arith.constant 0 : index
    %34 = vector.load %arg2[%c0_10, %c0_11] : memref<128x32xf32, #tpu.memory_space<vmem>>, vector<128x32xf32>
    %35 = arith.addf %33, %34 : vector<128x32xf32>
    %cst_12 = arith.constant dense<0xFF800000> : vector<128xf32>
    %36 = vector.multi_reduction <maximumf>, %35, %cst_12 [1] : vector<128x32xf32> to vector<128xf32>
    %37 = vector.shape_cast %36 : vector<128xf32> to vector<128x1xf32>
    %38 = vector.broadcast %37 : vector<128x1xf32> to vector<128x32xf32>
    %39 = arith.subf %35, %38 : vector<128x32xf32>
    %40 = math.exp %39 : vector<128x32xf32>
    %cst_13 = arith.constant dense<0.000000e+00> : vector<128xf32>
    %41 = vector.multi_reduction <add>, %40, %cst_13 [1] : vector<128x32xf32> to vector<128xf32>
    %42 = vector.shape_cast %41 : vector<128xf32> to vector<128x1xf32>
    %43 = tpu.reciprocal %42 {approx = true} : vector<128x1xf32> -> vector<128x1xf32>
    %44 = vector.broadcast %43 : vector<128x1xf32> to vector<128x32xf32>
    %45 = arith.mulf %40, %44 : vector<128x32xf32>
    %46 = arith.truncf %45 : vector<128x32xf32> to vector<128x32xbf16>
    %47 = arith.truncf %24 : vector<32x64xf32> to vector<32x64xbf16>
    %cst_14 = arith.constant dense<0.000000e+00> : vector<128x64xf32>
    %48 = tpu.matmul %46, %47, %cst_14 {dimension_numbers = #tpu.dot_dimension_numbers<[1], [0], [0], [1], [0, 0, 1, 1], [], []>} : vector<128x32xbf16>, vector<32x64xbf16>, vector<128x64xf32> -> vector<128x64xf32>
    %49 = arith.mulf %48, %25 : vector<128x64xf32>
    %50 = vector.extract_strided_slice %49 {offsets = [0, 0], sizes = [32, 64], strides = [1, 1]} : vector<128x64xf32> to vector<32x64xf32>
    %51 = vector.extract_strided_slice %49 {offsets = [32, 0], sizes = [32, 64], strides = [1, 1]} : vector<128x64xf32> to vector<32x64xf32>
    %52 = arith.addf %50, %51 : vector<32x64xf32>
    %53 = vector.extract_strided_slice %49 {offsets = [64, 0], sizes = [32, 64], strides = [1, 1]} : vector<128x64xf32> to vector<32x64xf32>
    %54 = arith.addf %52, %53 : vector<32x64xf32>
    %55 = vector.extract_strided_slice %49 {offsets = [96, 0], sizes = [32, 64], strides = [1, 1]} : vector<128x64xf32> to vector<32x64xf32>
    %56 = arith.addf %54, %55 : vector<32x64xf32>
    %57 = arith.truncf %56 : vector<32x64xf32> to vector<32x64xbf16>
    %58 = vector.extract_strided_slice %12 {offsets = [192, 0], sizes = [64, 64], strides = [1, 1]} : vector<256x64xbf16> to vector<64x64xbf16>
    %cst_15 = arith.constant dense<0.000000e+00> : vector<32x64xf32>
    %59 = tpu.matmul %57, %58, %cst_15 {dimension_numbers = #tpu.dot_dimension_numbers<[1], [0], [0], [1], [0, 0, 1, 1], [], []>} : vector<32x64xbf16>, vector<64x64xbf16>, vector<32x64xf32> -> vector<32x64xf32>
    %60 = vector.broadcast %6 : vector<1x64xf32> to vector<32x64xf32>
    %61 = arith.addf %59, %60 : vector<32x64xf32>
    %62 = arith.addf %0, %61 : vector<32x64xf32>
    %cst_16 = arith.constant dense<0.000000e+00> : vector<32xf32>
    %63 = vector.multi_reduction <add>, %62, %cst_16 [1] : vector<32x64xf32> to vector<32xf32>
    %64 = vector.shape_cast %63 : vector<32xf32> to vector<32x1xf32>
    %cst_17 = arith.constant 6.400000e+01 : f32
    %65 = vector.broadcast %cst_17 : f32 to vector<32x1xf32>
    %66 = arith.divf %64, %65 : vector<32x1xf32>
    %67 = arith.mulf %62, %62 : vector<32x64xf32>
    %cst_18 = arith.constant dense<0.000000e+00> : vector<32xf32>
    %68 = vector.multi_reduction <add>, %67, %cst_18 [1] : vector<32x64xf32> to vector<32xf32>
    %69 = vector.shape_cast %68 : vector<32xf32> to vector<32x1xf32>
    %cst_19 = arith.constant 6.400000e+01 : f32
    %70 = vector.broadcast %cst_19 : f32 to vector<32x1xf32>
    %71 = arith.divf %69, %70 : vector<32x1xf32>
    %72 = arith.mulf %66, %66 : vector<32x1xf32>
    %73 = arith.subf %71, %72 : vector<32x1xf32>
    %74 = vector.broadcast %66 : vector<32x1xf32> to vector<32x64xf32>
    %75 = arith.subf %62, %74 : vector<32x64xf32>
    %cst_20 = arith.constant 9.99999996E-13 : f32
    %76 = vector.broadcast %cst_20 : f32 to vector<32x1xf32>
    %77 = arith.addf %73, %76 : vector<32x1xf32>
    %78 = math.rsqrt %77 : vector<32x1xf32>
    %79 = vector.broadcast %78 : vector<32x1xf32> to vector<32x64xf32>
    %80 = arith.mulf %75, %79 : vector<32x64xf32>
    %81 = vector.broadcast %7 : vector<1x64xf32> to vector<32x64xf32>
    %82 = arith.mulf %80, %81 : vector<32x64xf32>
    %83 = vector.broadcast %8 : vector<1x64xf32> to vector<32x64xf32>
    %84 = arith.addf %82, %83 : vector<32x64xf32>
    %85 = arith.truncf %84 : vector<32x64xf32> to vector<32x64xbf16>
    %c0_21 = arith.constant 0 : index
    %c0_22 = arith.constant 0 : index
    %86 = vector.load %arg5[%c0_21, %c0_22] : memref<64x256xbf16, #tpu.memory_space<vmem>>, vector<64x256xbf16>
    %cst_23 = arith.constant dense<0.000000e+00> : vector<32x256xf32>
    %87 = tpu.matmul %85, %86, %cst_23 {dimension_numbers = #tpu.dot_dimension_numbers<[1], [0], [0], [1], [0, 0, 1, 1], [], []>} : vector<32x64xbf16>, vector<64x256xbf16>, vector<32x256xf32> -> vector<32x256xf32>
    %c0_24 = arith.constant 0 : index
    %c0_25 = arith.constant 0 : index
    %88 = vector.load %arg8[%c0_24, %c0_25] : memref<1x256xf32, #tpu.memory_space<vmem>>, vector<1x256xf32>
    %89 = vector.broadcast %88 : vector<1x256xf32> to vector<32x256xf32>
    %90 = arith.addf %87, %89 : vector<32x256xf32>
    %91 = arith.mulf %90, %90 : vector<32x256xf32>
    %92 = arith.mulf %90, %91 : vector<32x256xf32>
    %cst_26 = arith.constant 4.471500e-02 : f32
    %93 = vector.broadcast %cst_26 : f32 to vector<32x256xf32>
    %94 = arith.mulf %93, %92 : vector<32x256xf32>
    %95 = arith.addf %90, %94 : vector<32x256xf32>
    %cst_27 = arith.constant 0.797884583 : f32
    %96 = vector.broadcast %cst_27 : f32 to vector<32x256xf32>
    %97 = arith.mulf %96, %95 : vector<32x256xf32>
    %98 = math.tanh %97 : vector<32x256xf32>
    %cst_28 = arith.constant 1.000000e+00 : f32
    %99 = vector.broadcast %cst_28 : f32 to vector<32x256xf32>
    %100 = arith.addf %99, %98 : vector<32x256xf32>
    %cst_29 = arith.constant 5.000000e-01 : f32
    %101 = vector.broadcast %cst_29 : f32 to vector<32x256xf32>
    %102 = arith.mulf %101, %100 : vector<32x256xf32>
    %103 = arith.mulf %90, %102 : vector<32x256xf32>
    %104 = arith.truncf %103 : vector<32x256xf32> to vector<32x256xbf16>
    %c0_30 = arith.constant 0 : index
    %c0_31 = arith.constant 0 : index
    %105 = vector.load %arg6[%c0_30, %c0_31] : memref<256x64xbf16, #tpu.memory_space<vmem>>, vector<256x64xbf16>
    %cst_32 = arith.constant dense<0.000000e+00> : vector<32x64xf32>
    %106 = tpu.matmul %104, %105, %cst_32 {dimension_numbers = #tpu.dot_dimension_numbers<[1], [0], [0], [1], [0, 0, 1, 1], [], []>} : vector<32x256xbf16>, vector<256x64xbf16>, vector<32x64xf32> -> vector<32x64xf32>
    %107 = vector.broadcast %9 : vector<1x64xf32> to vector<32x64xf32>
    %108 = arith.addf %106, %107 : vector<32x64xf32>
    %109 = arith.addf %84, %108 : vector<32x64xf32>
    %cst_33 = arith.constant dense<0.000000e+00> : vector<32xf32>
    %110 = vector.multi_reduction <add>, %109, %cst_33 [1] : vector<32x64xf32> to vector<32xf32>
    %111 = vector.shape_cast %110 : vector<32xf32> to vector<32x1xf32>
    %cst_34 = arith.constant 6.400000e+01 : f32
    %112 = vector.broadcast %cst_34 : f32 to vector<32x1xf32>
    %113 = arith.divf %111, %112 : vector<32x1xf32>
    %114 = arith.mulf %109, %109 : vector<32x64xf32>
    %cst_35 = arith.constant dense<0.000000e+00> : vector<32xf32>
    %115 = vector.multi_reduction <add>, %114, %cst_35 [1] : vector<32x64xf32> to vector<32xf32>
    %116 = vector.shape_cast %115 : vector<32xf32> to vector<32x1xf32>
    %cst_36 = arith.constant 6.400000e+01 : f32
    %117 = vector.broadcast %cst_36 : f32 to vector<32x1xf32>
    %118 = arith.divf %116, %117 : vector<32x1xf32>
    %119 = arith.mulf %113, %113 : vector<32x1xf32>
    %120 = arith.subf %118, %119 : vector<32x1xf32>
    %121 = vector.broadcast %113 : vector<32x1xf32> to vector<32x64xf32>
    %122 = arith.subf %109, %121 : vector<32x64xf32>
    %cst_37 = arith.constant 9.99999996E-13 : f32
    %123 = vector.broadcast %cst_37 : f32 to vector<32x1xf32>
    %124 = arith.addf %120, %123 : vector<32x1xf32>
    %125 = math.rsqrt %124 : vector<32x1xf32>
    %126 = vector.broadcast %125 : vector<32x1xf32> to vector<32x64xf32>
    %127 = arith.mulf %122, %126 : vector<32x64xf32>
    %128 = vector.broadcast %10 : vector<1x64xf32> to vector<32x64xf32>
    %129 = arith.mulf %127, %128 : vector<32x64xf32>
    %130 = vector.broadcast %11 : vector<1x64xf32> to vector<32x64xf32>
    %131 = arith.addf %129, %130 : vector<32x64xf32>
    %c0_38 = arith.constant 0 : index
    %c0_39 = arith.constant 0 : index
    %132 = vector.load %arg9[%c0_38, %c0_39] : memref<32x64xf32, #tpu.memory_space<vmem>>, vector<32x64xf32>
    tpu.vector_store %arg9[%c0_38, %c0_39], %131 {strides = array<i32>} : memref<32x64xf32, #tpu.memory_space<vmem>>, vector<32x64xf32>,
    return
  }
  func.func @transform_0(%arg0: i32) -> (i32, i32) {
    %c0_i32 = arith.constant 0 : i32
    %c0_i32_0 = arith.constant 0 : i32
    %c0_i32_1 = arith.constant 0 : i32
    return %c0_i32, %c0_i32_0 : i32, i32
  }
  func.func @transform_1(%arg0: i32) -> (i32, i32) {
    %c0_i32 = arith.constant 0 : i32
    %c0_i32_0 = arith.constant 0 : i32
    %c0_i32_1 = arith.constant 0 : i32
    return %c0_i32, %c0_i32_0 : i32, i32
  }
  func.func @transform_2(%arg0: i32) -> (i32, i32) {
    %c0_i32 = arith.constant 0 : i32
    %c0_i32_0 = arith.constant 0 : i32
    %c0_i32_1 = arith.constant 0 : i32
    return %c0_i32, %c0_i32_0 : i32, i32
  }
  func.func @transform_3(%arg0: i32) -> (i32, i32) {
    %c0_i32 = arith.constant 0 : i32
    %c0_i32_0 = arith.constant 0 : i32
    %c0_i32_1 = arith.constant 0 : i32
    return %c0_i32, %c0_i32_0 : i32, i32
  }
  func.func @transform_4(%arg0: i32) -> (i32, i32) {
    %c0_i32 = arith.constant 0 : i32
    %c0_i32_0 = arith.constant 0 : i32
    %c0_i32_1 = arith.constant 0 : i32
    return %c0_i32, %c0_i32_0 : i32, i32
  }
  func.func @transform_5(%arg0: i32) -> (i32, i32) {
    %c0_i32 = arith.constant 0 : i32
    %c0_i32_0 = arith.constant 0 : i32
    %c0_i32_1 = arith.constant 0 : i32
    return %c0_i32, %c0_i32_0 : i32, i32
  }
  func.func @transform_6(%arg0: i32) -> (i32, i32) {
    %c0_i32 = arith.constant 0 : i32
    %c0_i32_0 = arith.constant 0 : i32
    %c0_i32_1 = arith.constant 0 : i32
    return %c0_i32, %c0_i32_0 : i32, i32
  }
  func.func @transform_7(%arg0: i32) -> (i32, i32) {
    %c0_i32 = arith.constant 0 : i32
    %c0_i32_0 = arith.constant 0 : i32
    %c0_i32_1 = arith.constant 0 : i32
    return %c0_i32, %c0_i32_0 : i32, i32
  }
  func.func @transform_8(%arg0: i32) -> (i32, i32) {
    %c0_i32 = arith.constant 0 : i32
    %c0_i32_0 = arith.constant 0 : i32
    %c0_i32_1 = arith.constant 0 : i32
    return %c0_i32, %c0_i32_0 : i32, i32
  }
}

</mosaic_0001>

<llo_original>
// kernel: bert_layer_pallas.1
$region0: #{bert_layer_pallas.1}
  #allocation0 [shape = 'u32[]', space=smem, size = 0x4, offset = 0x4, fixed_abs, tag = 'smem constant byte address 0x4 - core index']
  #allocation1 [shape = 'u32[72,128]{1,0:T(1,128)}', space=vmem, size = 0x9000, scoped, tag = 'internal scratch']
  %s0 = inlined_call_operand.vmem [shape: f32[32,64], index: 0, kind: input, shape index: {}]
  %s1 = inlined_call_operand.vmem [shape: f32[128,32], index: 1, kind: input, shape index: {}]
  %s2 = inlined_call_operand.vmem [shape: f32[128,64], index: 2, kind: input, shape index: {}]
  %s3 = inlined_call_operand.vmem [shape: bf16[256,64], index: 3, kind: input, shape index: {}]
  %s4 = inlined_call_operand.vmem [shape: bf16[64,256], index: 4, kind: input, shape index: {}]
  %s5 = inlined_call_operand.vmem [shape: bf16[256,64], index: 5, kind: input, shape index: {}]
  %s6 = inlined_call_operand.vmem [shape: f32[9,64], index: 6, kind: input, shape index: {}]
  %s7 = inlined_call_operand.vmem [shape: f32[1,256], index: 7, kind: input, shape index: {}]
  %s8 = inlined_call_operand.hbm [shape: f32[32,64], index: 8, kind: output, shape index: {}]
  %s9 = sld [smem:[#allocation0]]
  $region42: #{bert_layer_pallas.1} parent=0
    _
  %s11 = ssub.s32 1, %s9
  %s12 = scalar_select 0, %s11, %s9
  $region1: #{bert_layer_pallas.1} parent=0
    #allocation2 [shape = 'u8[16384]{0}', space=vmem, size = 0x4000, scoped, tag = 'output window, operand 0, single buffered']
    #allocation3 [shape = 's32[1]{0}', space=sflag, size = 0x4, scoped, tag = 'scoped memory for bert_layer_pallas.1']
    %13 = vsyncpa [#allocation3], 0
    // Predicated region
    $region2: #{bert_layer_pallas.1} parent=1 // pred_check
      _
    $region3: #{bert_layer_pallas.1} parent=1 // pred_check_branch
      %15 = sbr.rel (0) target = $region5
    $region4: #{bert_layer_pallas.1} parent=1 // pred_region
      _
    $region5: #{bert_layer_pallas.1} parent=1 // pred_fallthru
      _
    // Predicated region
    $region6: #{bert_layer_pallas.1} parent=1 // pred_check
      _
    $region7: #{bert_layer_pallas.1} parent=1 // pred_check_branch
      %17 = sbr.rel (0) target = $region9
    $region8: #{bert_layer_pallas.1} parent=1 // pred_region
      _
    $region9: #{bert_layer_pallas.1} parent=1 // pred_fallthru
      _
    // Predicated region
    $region10: #{bert_layer_pallas.1} parent=1 // pred_check
      _
    $region11: #{bert_layer_pallas.1} parent=1 // pred_check_branch
      %19 = sbr.rel (0) target = $region13
    $region12: #{bert_layer_pallas.1} parent=1 // pred_region
      _
    $region13: #{bert_layer_pallas.1} parent=1 // pred_fallthru
      _
    // Predicated region
    $region14: #{bert_layer_pallas.1} parent=1 // pred_check
      _
    $region15: #{bert_layer_pallas.1} parent=1 // pred_check_branch
      %21 = sbr.rel (0) target = $region17
    $region16: #{bert_layer_pallas.1} parent=1 // pred_region
      _
    $region17: #{bert_layer_pallas.1} parent=1 // pred_fallthru
      _
    // Predicated region
    $region18: #{bert_layer_pallas.1} parent=1 // pred_check
      _
    $region19: #{bert_layer_pallas.1} parent=1 // pred_check_branch
      %23 = sbr.rel (0) target = $region21
    $region20: #{bert_layer_pallas.1} parent=1 // pred_region
      _
    $region21: #{bert_layer_pallas.1} parent=1 // pred_fallthru
      _
    // Predicated region
    $region22: #{bert_layer_pallas.1} parent=1 // pred_check
      _
    $region23: #{bert_layer_pallas.1} parent=1 // pred_check_branch
      %25 = sbr.rel (0) target = $region25
    $region24: #{bert_layer_pallas.1} parent=1 // pred_region
      _
    $region25: #{bert_layer_pallas.1} parent=1 // pred_fallthru
      _
    // Predicated region
    $region26: #{bert_layer_pallas.1} parent=1 // pred_check
      _
    $region27: #{bert_layer_pallas.1} parent=1 // pred_check_branch
      %27 = sbr.rel (0) target = $region29
    $region28: #{bert_layer_pallas.1} parent=1 // pred_region
      _
    $region29: #{bert_layer_pallas.1} parent=1 // pred_fallthru
      _
    // Predicated region
    $region30: #{bert_layer_pallas.1} parent=1 // pred_check
      _
    $region31: #{bert_layer_pallas.1} parent=1 // pred_check_branch
      %29 = sbr.rel (0) target = $region33
    $region32: #{bert_layer_pallas.1} parent=1 // pred_region
      _
    $region33: #{bert_layer_pallas.1} parent=1 // pred_fallthru
      _
    %v31 = vld [vmem:[%s0] sm:$0xff]
    %v32 = vld [vmem:[%s0 + $0x8] sm:$0xff]
    %v33 = vld [vmem:[%s0 + $0x10] sm:$0xff]
    %v34 = vld [vmem:[%s0 + $0x18] sm:$0xff]
    %v35 = vpack.c.bf16 %v32, %v31
    %v36 = vpack.c.bf16 %v34, %v33
    %v37 = vld [vmem:[%s6] sm:$0xff]
    %v38 = vld [vmem:[%s6 + $0x8] sm:$0x1]
    %v39 = vld [vmem:[%s3] sm:$0xf]
    %v40 = vld [vmem:[%s3 + $0x4] sm:$0xf]
    %v41 = vld [vmem:[%s3 + $0x8] sm:$0xf]
    %v42 = vld [vmem:[%s3 + $0xc] sm:$0xf]
    %v43 = vld [vmem:[%s3 + $0x10] sm:$0xf]
    %v44 = vld [vmem:[%s3 + $0x14] sm:$0xf]
    %v45 = vld [vmem:[%s3 + $0x18] sm:$0xf]
    %v46 = vld [vmem:[%s3 + $0x1c] sm:$0xf]
    %v47 = vld [vmem:[%s3 + $0x20] sm:$0xf]
    %v48 = vld [vmem:[%s3 + $0x24] sm:$0xf]
    %v49 = vld [vmem:[%s3 + $0x28] sm:$0xf]
    %v50 = vld [vmem:[%s3 + $0x2c] sm:$0xf]
    %v51 = vld [vmem:[%s3 + $0x30] sm:$0xf]
    %v52 = vld [vmem:[%s3 + $0x34] sm:$0xf]
    %v53 = vld [vmem:[%s3 + $0x38] sm:$0xf]
    %v54 = vld [vmem:[%s3 + $0x3c] sm:$0xf]
    %v55 = vld [vmem:[%s3 + $0x40] sm:$0xf]
    %v56 = vld [vmem:[%s3 + $0x44] sm:$0xf]
    %v57 = vld [vmem:[%s3 + $0x48] sm:$0xf]
    %v58 = vld [vmem:[%s3 + $0x4c] sm:$0xf]
    %v59 = vld [vmem:[%s3 + $0x50] sm:$0xf]
    %v60 = vld [vmem:[%s3 + $0x54] sm:$0xf]
    %v61 = vld [vmem:[%s3 + $0x58] sm:$0xf]
    %v62 = vld [vmem:[%s3 + $0x5c] sm:$0xf]
    %v63 = vld [vmem:[%s3 + $0x60] sm:$0xf]
    %v64 = vld [vmem:[%s3 + $0x64] sm:$0xf]
    %v65 = vld [vmem:[%s3 + $0x68] sm:$0xf]
    %v66 = vld [vmem:[%s3 + $0x6c] sm:$0xf]
    %v67 = vld [vmem:[%s3 + $0x70] sm:$0xf]
    %v68 = vld [vmem:[%s3 + $0x74] sm:$0xf]
    %v69 = vld [vmem:[%s3 + $0x78] sm:$0xf]
    %v70 = vld [vmem:[%s3 + $0x7c] sm:$0xf]
    %v71 = vperm.slane %v37, 0
    %v80 = vunpack.c.l.b16 %v39
    %v81 = vunpack.c.l.b16 %v40
    %v82 = vunpack.c.l.b16 %v41
    %v83 = vunpack.c.l.b16 %v42
    %v84 = vunpack.c.l.b16 %v43
    %v85 = vunpack.c.l.b16 %v44
    %v86 = vunpack.c.l.b16 %v45
    %v87 = vunpack.c.l.b16 %v46
    %v88 = vpack.c.b16 %v81, %v80
    %v89 = vpack.c.b16 %v83, %v82
    %v90 = vpack.c.b16 %v85, %v84
    %v91 = vpack.c.b16 %v87, %v86
    %vm96 = vcmask 523264
    %v98 = vsel %vm96, %v35, 0
    %v101 = vsel %vm96, %v36, 0
    %103 = vmatpush.bf16.msra.mxu0 0
    %104 = vmatpush.bf16.msra.mxu0 0
    %105 = vmatpush.bf16.msra.mxu0 0
    %106 = vmatpush.bf16.msra.mxu0 0
    %107 = vmatpush.bf16.msra.mxu0 %v91
    %108 = vmatpush.bf16.msra.mxu0 %v90
    %109 = vmatpush.bf16.msra.mxu0 %v89
    %110 = vmatpush.bf16.msra.mxu0 %v88
    %111 = vmatmul.bf16.gmra.mxu0 %v98
    %v112 = vpop.f32.mrf.mxu0
    %v113 = vadd.f32 %v71, %v112
    %v114 = vpop.f32.mrf.mxu0
    %v115 = vadd.f32 %v71, %v114
    %116 = vmatmul.bf16.gmra.mxu0 %v101
    %v117 = vpop.f32.mrf.mxu0
    %v118 = vadd.f32 %v71, %v117
    %v119 = vpop.f32.mrf.mxu0
    %v120 = vadd.f32 %v71, %v119
    %121 = vdwg.mxu0
    %v122 = vperm.slane %v37, 1
    %v131 = vunpack.c.l.b16 %v47
    %v132 = vunpack.c.l.b16 %v48
    %v133 = vunpack.c.l.b16 %v49
    %v134 = vunpack.c.l.b16 %v50
    %v135 = vunpack.c.l.b16 %v51
    %v136 = vunpack.c.l.b16 %v52
    %v137 = vunpack.c.l.b16 %v53
    %v138 = vunpack.c.l.b16 %v54
    %v139 = vpack.c.b16 %v132, %v131
    %v140 = vpack.c.b16 %v134, %v133
    %v141 = vpack.c.b16 %v136, %v135
    %v142 = vpack.c.b16 %v138, %v137
    %147 = vmatpush.bf16.msra.mxu0 0
    %148 = vmatpush.bf16.msra.mxu0 0
    %149 = vmatpush.bf16.msra.mxu0 0
    %150 = vmatpush.bf16.msra.mxu0 0
    %151 = vmatpush.bf16.msra.mxu0 %v142
    %152 = vmatpush.bf16.msra.mxu0 %v141
    %153 = vmatpush.bf16.msra.mxu0 %v140
    %154 = vmatpush.bf16.msra.mxu0 %v139
    %155 = vmatmul.bf16.gmra.mxu0 %v98
    %v156 = vpop.f32.mrf.mxu0
    %v157 = vadd.f32 %v122, %v156
    %v158 = vpop.f32.mrf.mxu0
    %v159 = vadd.f32 %v122, %v158
    %160 = vmatmul.bf16.gmra.mxu0 %v101
    %v161 = vpop.f32.mrf.mxu0
    %v162 = vadd.f32 %v122, %v161
    %v163 = vpop.f32.mrf.mxu0
    %v164 = vadd.f32 %v122, %v163
    %165 = vdwg.mxu0
    %v166 = vperm.slane %v37, 2
    %v175 = vunpack.c.l.b16 %v55
    %v176 = vunpack.c.l.b16 %v56
    %v177 = vunpack.c.l.b16 %v57
    %v178 = vunpack.c.l.b16 %v58
    %v179 = vunpack.c.l.b16 %v59
    %v180 = vunpack.c.l.b16 %v60
    %v181 = vunpack.c.l.b16 %v61
    %v182 = vunpack.c.l.b16 %v62
    %v183 = vpack.c.b16 %v176, %v175
    %v184 = vpack.c.b16 %v178, %v177
    %v185 = vpack.c.b16 %v180, %v179
    %v186 = vpack.c.b16 %v182, %v181
    %191 = vmatpush.bf16.msra.mxu0 0
    %192 = vmatpush.bf16.msra.mxu0 0
    %193 = vmatpush.bf16.msra.mxu0 0
    %194 = vmatpush.bf16.msra.mxu0 0
    %195 = vmatpush.bf16.msra.mxu0 %v186
    %196 = vmatpush.bf16.msra.mxu0 %v185
    %197 = vmatpush.bf16.msra.mxu0 %v184
    %198 = vmatpush.bf16.msra.mxu0 %v183
    %199 = vmatmul.bf16.gmra.mxu0 %v98
    %v200 = vpop.f32.mrf.mxu0
    %v201 = vadd.f32 %v166, %v200
    %v202 = vpop.f32.mrf.mxu0
    %v203 = vadd.f32 %v166, %v202
    %204 = vmatmul.bf16.gmra.mxu0 %v101
    %v205 = vpop.f32.mrf.mxu0
    %v206 = vadd.f32 %v166, %v205
    %v207 = vpop.f32.mrf.mxu0
    %v208 = vadd.f32 %v166, %v207
    %209 = vdwg.mxu0
    %v210 = vld [vmem:[%s2] sm:$0xff]
    %v211 = vld [vmem:[%s2 + $0x8] sm:$0xff]
    %v212 = vld [vmem:[%s2 + $0x10] sm:$0xff]
    %v213 = vld [vmem:[%s2 + $0x18] sm:$0xff]
    %v214 = vld [vmem:[%s2 + $0x20] sm:$0xff]
    %v215 = vld [vmem:[%s2 + $0x28] sm:$0xff]
    %v216 = vld [vmem:[%s2 + $0x30] sm:$0xff]
    %v217 = vld [vmem:[%s2 + $0x38] sm:$0xff]
    %v218 = vld [vmem:[%s2 + $0x40] sm:$0xff]
    %v219 = vld [vmem:[%s2 + $0x48] sm:$0xff]
    %v220 = vld [vmem:[%s2 + $0x50] sm:$0xff]
    %v221 = vld [vmem:[%s2 + $0x58] sm:$0xff]
    %v222 = vld [vmem:[%s2 + $0x60] sm:$0xff]
    %v223 = vld [vmem:[%s2 + $0x68] sm:$0xff]
    %v224 = vld [vmem:[%s2 + $0x70] sm:$0xff]
    %v225 = vld [vmem:[%s2 + $0x78] sm:$0xff]
    %v226 = vmul.f32 %v113, %v210
    %v227 = vmul.f32 %v115, %v211
    %v228 = vmul.f32 %v118, %v212
    %v229 = vmul.f32 %v120, %v213
    %v230 = vmul.f32 %v113, %v214
    %v231 = vmul.f32 %v115, %v215
    %v232 = vmul.f32 %v118, %v216
    %v233 = vmul.f32 %v120, %v217
    %v234 = vmul.f32 %v113, %v218
    %v235 = vmul.f32 %v115, %v219
    %v236 = vmul.f32 %v118, %v220
    %v237 = vmul.f32 %v120, %v221
    %v238 = vmul.f32 %v113, %v222
    %v239 = vmul.f32 %v115, %v223
    %v240 = vmul.f32 %v118, %v224
    %v241 = vmul.f32 %v120, %v225
    %v242 = vpack.c.bf16 %v227, %v226
    %v243 = vpack.c.bf16 %v229, %v228
    %v244 = vpack.c.bf16 %v231, %v230
    %v245 = vpack.c.bf16 %v233, %v232
    %v246 = vpack.c.bf16 %v235, %v234
    %v247 = vpack.c.bf16 %v237, %v236
    %v248 = vpack.c.bf16 %v239, %v238
    %v249 = vpack.c.bf16 %v241, %v240
    %v250 = vpack.c.bf16 %v159, %v157
    %v251 = vpack.c.bf16 %v164, %v162
    %v252 = vld [vmem:[%s1] sm:$0xff]
    %v253 = vld [vmem:[%s1 + $0x8] sm:$0xff]
    %v254 = vld [vmem:[%s1 + $0x10] sm:$0xff]
    %v255 = vld [vmem:[%s1 + $0x18] sm:$0xff]
    %v256 = vld [vmem:[%s1 + $0x20] sm:$0xff]
    %v257 = vld [vmem:[%s1 + $0x28] sm:$0xff]
    %v258 = vld [vmem:[%s1 + $0x30] sm:$0xff]
    %v259 = vld [vmem:[%s1 + $0x38] sm:$0xff]
    %v260 = vld [vmem:[%s1 + $0x40] sm:$0xff]
    %v261 = vld [vmem:[%s1 + $0x48] sm:$0xff]
    %v262 = vld [vmem:[%s1 + $0x50] sm:$0xff]
    %v263 = vld [vmem:[%s1 + $0x58] sm:$0xff]
    %v264 = vld [vmem:[%s1 + $0x60] sm:$0xff]
    %v265 = vld [vmem:[%s1 + $0x68] sm:$0xff]
    %v266 = vld [vmem:[%s1 + $0x70] sm:$0xff]
    %v267 = vld [vmem:[%s1 + $0x78] sm:$0xff]
    %v269 = vsel %vm96, %v242, 0
    %v272 = vsel %vm96, %v243, 0
    %v275 = vsel %vm96, %v244, 0
    %v278 = vsel %vm96, %v245, 0
    %v281 = vsel %vm96, %v246, 0
    %v284 = vsel %vm96, %v247, 0
    %v287 = vsel %vm96, %v248, 0
    %v290 = vsel %vm96, %v249, 0
    %v293 = vsel %vm96, %v250, 0
    %v296 = vsel %vm96, %v251, 0
    %298 = vmatpush.bf16.xpose.msra.mxu0 0
    %299 = vmatpush.bf16.xpose.msra.mxu0 0
    %300 = vmatpush.bf16.xpose.msra.mxu0 0
    %301 = vmatpush.bf16.xpose.msra.mxu0 0
    %302 = vmatpush.bf16.xpose.msra.mxu0 0
    %303 = vmatpush.bf16.xpose.msra.mxu0 0
    %304 = vmatpush.bf16.xpose.msra.mxu0 %v296
    %305 = vmatpush.bf16.xpose.msra.mxu0 %v293
    %306 = vmatmul.bf16.gmra.mxu0 %v269
    %v307 = vpop.f32.mrf.mxu0
    %v308 = vadd.f32 %v252, %v307
    %v309 = vpop.f32.mrf.mxu0
    %v310 = vadd.f32 %v253, %v309
    %311 = vmatmul.bf16.gmra.mxu0 %v272
    %v312 = vpop.f32.mrf.mxu0
    %v313 = vadd.f32 %v254, %v312
    %v314 = vpop.f32.mrf.mxu0
    %v315 = vadd.f32 %v255, %v314
    %316 = vmatmul.bf16.gmra.mxu0 %v275
    %v317 = vpop.f32.mrf.mxu0
    %v318 = vadd.f32 %v256, %v317
    %v319 = vpop.f32.mrf.mxu0
    %v320 = vadd.f32 %v257, %v319
    %321 = vmatmul.bf16.gmra.mxu0 %v278
    %v322 = vpop.f32.mrf.mxu0
    %v323 = vadd.f32 %v258, %v322
    %v324 = vpop.f32.mrf.mxu0
    %v325 = vadd.f32 %v259, %v324
    %326 = vmatmul.bf16.gmra.mxu0 %v281
    %v327 = vpop.f32.mrf.mxu0
    %v328 = vadd.f32 %v260, %v327
    %v329 = vpop.f32.mrf.mxu0
    %v330 = vadd.f32 %v261, %v329
    %331 = vmatmul.bf16.gmra.mxu0 %v284
    %v332 = vpop.f32.mrf.mxu0
    %v333 = vadd.f32 %v262, %v332
    %v334 = vpop.f32.mrf.mxu0
    %v335 = vadd.f32 %v263, %v334
    %336 = vmatmul.bf16.gmra.mxu0 %v287
    %v337 = vpop.f32.mrf.mxu0
    %v338 = vadd.f32 %v264, %v337
    %v339 = vpop.f32.mrf.mxu0
    %v340 = vadd.f32 %v265, %v339
    %341 = vmatmul.bf16.gmra.mxu0 %v290
    %v342 = vpop.f32.mrf.mxu0
    %v343 = vadd.f32 %v266, %v342
    %v344 = vpop.f32.mrf.mxu0
    %v345 = vadd.f32 %v267, %v344
    %346 = vdwg.mxu0
    %vm347 = vcmask 261120
    %v348 = vsel %vm347, %v308, -inf
    %349 = vmax.xlane.f32.xlu0 %v348
    %v350 = vpop.xlane.xlu0 %349
    %v351 = vsel %vm347, %v310, -inf
    %352 = vmax.xlane.f32.xlu0 %v351
    %v353 = vpop.xlane.xlu0 %352
    %v354 = vsel %vm347, %v313, -inf
    %355 = vmax.xlane.f32.xlu0 %v354
    %v356 = vpop.xlane.xlu0 %355
    %v357 = vsel %vm347, %v315, -inf
    %358 = vmax.xlane.f32.xlu0 %v357
    %v359 = vpop.xlane.xlu0 %358
    %v360 = vsel %vm347, %v318, -inf
    %361 = vmax.xlane.f32.xlu0 %v360
    %v362 = vpop.xlane.xlu0 %361
    %v363 = vsel %vm347, %v320, -inf
    %364 = vmax.xlane.f32.xlu0 %v363
    %v365 = vpop.xlane.xlu0 %364
    %v366 = vsel %vm347, %v323, -inf
    %367 = vmax.xlane.f32.xlu0 %v366
    %v368 = vpop.xlane.xlu0 %367
    %v369 = vsel %vm347, %v325, -inf
    %370 = vmax.xlane.f32.xlu0 %v369
    %v371 = vpop.xlane.xlu0 %370
    %v372 = vsel %vm347, %v328, -inf
    %373 = vmax.xlane.f32.xlu0 %v372
    %v374 = vpop.xlane.xlu0 %373
    %v375 = vsel %vm347, %v330, -inf
    %376 = vmax.xlane.f32.xlu0 %v375
    %v377 = vpop.xlane.xlu0 %376
    %v378 = vsel %vm347, %v333, -inf
    %379 = vmax.xlane.f32.xlu0 %v378
    %v380 = vpop.xlane.xlu0 %379
    %v381 = vsel %vm347, %v335, -inf
    %382 = vmax.xlane.f32.xlu0 %v381
    %v383 = vpop.xlane.xlu0 %382
    %v384 = vsel %vm347, %v338, -inf
    %385 = vmax.xlane.f32.xlu0 %v384
    %v386 = vpop.xlane.xlu0 %385
    %v387 = vsel %vm347, %v340, -inf
    %388 = vmax.xlane.f32.xlu0 %v387
    %v389 = vpop.xlane.xlu0 %388
    %v390 = vsel %vm347, %v343, -inf
    %391 = vmax.xlane.f32.xlu0 %v390
    %v392 = vpop.xlane.xlu0 %391
    %v393 = vsel %vm347, %v345, -inf
    %394 = vmax.xlane.f32.xlu0 %v393
    %v395 = vpop.xlane.xlu0 %394
    %v396 = vsub.f32 %v308, %v350
    %v397 = vsub.f32 %v310, %v353
    %v398 = vsub.f32 %v313, %v356
    %v399 = vsub.f32 %v315, %v359
    %v400 = vsub.f32 %v318, %v362
    %v401 = vsub.f32 %v320, %v365
    %v402 = vsub.f32 %v323, %v368
    %v403 = vsub.f32 %v325, %v371
    %v404 = vsub.f32 %v328, %v374
    %v405 = vsub.f32 %v330, %v377
    %v406 = vsub.f32 %v333, %v380
    %v407 = vsub.f32 %v335, %v383
    %v408 = vsub.f32 %v338, %v386
    %v409 = vsub.f32 %v340, %v389
    %v410 = vsub.f32 %v343, %v392
    %v411 = vsub.f32 %v345, %v395
    %v412 = vmul.f32 %v396, 1.442695
    %v413 = vpow.pop %v412
    %v414 = vmul.f32 %v397, 1.442695
    %v415 = vpow.pop %v414
    %v416 = vmul.f32 %v398, 1.442695
    %v417 = vpow.pop %v416
    %v418 = vmul.f32 %v399, 1.442695
    %v419 = vpow.pop %v418
    %v420 = vmul.f32 %v400, 1.442695
    %v421 = vpow.pop %v420
    %v422 = vmul.f32 %v401, 1.442695
    %v423 = vpow.pop %v422
    %v424 = vmul.f32 %v402, 1.442695
    %v425 = vpow.pop %v424
    %v426 = vmul.f32 %v403, 1.442695
    %v427 = vpow.pop %v426
    %v428 = vmul.f32 %v404, 1.442695
    %v429 = vpow.pop %v428
    %v430 = vmul.f32 %v405, 1.442695
    %v431 = vpow.pop %v430
    %v432 = vmul.f32 %v406, 1.442695
    %v433 = vpow.pop %v432
    %v434 = vmul.f32 %v407, 1.442695
    %v435 = vpow.pop %v434
    %v436 = vmul.f32 %v408, 1.442695
    %v437 = vpow.pop %v436
    %v438 = vmul.f32 %v409, 1.442695
    %v439 = vpow.pop %v438
    %v440 = vmul.f32 %v410, 1.442695
    %v441 = vpow.pop %v440
    %v442 = vmul.f32 %v411, 1.442695
    %v443 = vpow.pop %v442
    %v444 = vsel %vm347, %v413, 0.0
    %445 = vadd.xlane.f32.xlu0 %v444
    %v446 = vpop.xlane.xlu0 %445
    %v447 = vsel %vm347, %v415, 0.0
    %448 = vadd.xlane.f32.xlu0 %v447
    %v449 = vpop.xlane.xlu0 %448
    %v450 = vsel %vm347, %v417, 0.0
    %451 = vadd.xlane.f32.xlu0 %v450
    %v452 = vpop.xlane.xlu0 %451
    %v453 = vsel %vm347, %v419, 0.0
    %454 = vadd.xlane.f32.xlu0 %v453
    %v455 = vpop.xlane.xlu0 %454
    %v456 = vsel %vm347, %v421, 0.0
    %457 = vadd.xlane.f32.xlu0 %v456
    %v458 = vpop.xlane.xlu0 %457
    %v459 = vsel %vm347, %v423, 0.0
    %460 = vadd.xlane.f32.xlu0 %v459
    %v461 = vpop.xlane.xlu0 %460
    %v462 = vsel %vm347, %v425, 0.0
    %463 = vadd.xlane.f32.xlu0 %v462
    %v464 = vpop.xlane.xlu0 %463
    %v465 = vsel %vm347, %v427, 0.0
    %466 = vadd.xlane.f32.xlu0 %v465
    %v467 = vpop.xlane.xlu0 %466
    %v468 = vsel %vm347, %v429, 0.0
    %469 = vadd.xlane.f32.xlu0 %v468
    %v470 = vpop.xlane.xlu0 %469
    %v471 = vsel %vm347, %v431, 0.0
    %472 = vadd.xlane.f32.xlu0 %v471
    %v473 = vpop.xlane.xlu0 %472
    %v474 = vsel %vm347, %v433, 0.0
    %475 = vadd.xlane.f32.xlu0 %v474
    %v476 = vpop.xlane.xlu0 %475
    %v477 = vsel %vm347, %v435, 0.0
    %478 = vadd.xlane.f32.xlu0 %v477
    %v479 = vpop.xlane.xlu0 %478
    %v480 = vsel %vm347, %v437, 0.0
    %481 = vadd.xlane.f32.xlu0 %v480
    %v482 = vpop.xlane.xlu0 %481
    %v483 = vsel %vm347, %v439, 0.0
    %484 = vadd.xlane.f32.xlu0 %v483
    %v485 = vpop.xlane.xlu0 %484
    %v486 = vsel %vm347, %v441, 0.0
    %487 = vadd.xlane.f32.xlu0 %v486
    %v488 = vpop.xlane.xlu0 %487
    %v489 = vsel %vm347, %v443, 0.0
    %490 = vadd.xlane.f32.xlu0 %v489
    %v491 = vpop.xlane.xlu0 %490
    %v492 = vrcp.pop %v446
    %v493 = vrcp.pop %v449
    %v494 = vrcp.pop %v452
    %v495 = vrcp.pop %v455
    %v496 = vrcp.pop %v458
    %v497 = vrcp.pop %v461
    %v498 = vrcp.pop %v464
    %v499 = vrcp.pop %v467
    %v500 = vrcp.pop %v470
    %v501 = vrcp.pop %v473
    %v502 = vrcp.pop %v476
    %v503 = vrcp.pop %v479
    %v504 = vrcp.pop %v482
    %v505 = vrcp.pop %v485
    %v506 = vrcp.pop %v488
    %v507 = vrcp.pop %v491
    %v508 = vmul.f32 %v413, %v492
    %v509 = vmul.f32 %v415, %v493
    %v510 = vmul.f32 %v417, %v494
    %v511 = vmul.f32 %v419, %v495
    %v512 = vmul.f32 %v421, %v496
    %v513 = vmul.f32 %v423, %v497
    %v514 = vmul.f32 %v425, %v498
    %v515 = vmul.f32 %v427, %v499
    %v516 = vmul.f32 %v429, %v500
    %v517 = vmul.f32 %v431, %v501
    %v518 = vmul.f32 %v433, %v502
    %v519 = vmul.f32 %v435, %v503
    %v520 = vmul.f32 %v437, %v504
    %v521 = vmul.f32 %v439, %v505
    %v522 = vmul.f32 %v441, %v506
    %v523 = vmul.f32 %v443, %v507
    %v524 = vpack.c.bf16 %v509, %v508
    %v525 = vpack.c.bf16 %v511, %v510
    %v526 = vpack.c.bf16 %v513, %v512
    %v527 = vpack.c.bf16 %v515, %v514
    %v528 = vpack.c.bf16 %v517, %v516
    %v529 = vpack.c.bf16 %v519, %v518
    %v530 = vpack.c.bf16 %v521, %v520
    %v531 = vpack.c.bf16 %v523, %v522
    %v532 = vpack.c.bf16 %v203, %v201
    %v533 = vpack.c.bf16 %v208, %v206
    %v535 = vsel %vm347, %v524, 0
    %v538 = vsel %vm347, %v525, 0
    %v541 = vsel %vm347, %v526, 0
    %v544 = vsel %vm347, %v527, 0
    %v547 = vsel %vm347, %v528, 0
    %v550 = vsel %vm347, %v529, 0
    %v553 = vsel %vm347, %v530, 0
    %v556 = vsel %vm347, %v531, 0
    %558 = vmatpush.bf16.msra.mxu0 0
    %559 = vmatpush.bf16.msra.mxu0 0
    %560 = vmatpush.bf16.msra.mxu0 0
    %561 = vmatpush.bf16.msra.mxu0 0
    %562 = vmatpush.bf16.msra.mxu0 0
    %563 = vmatpush.bf16.msra.mxu0 0
    %564 = vmatpush.bf16.msra.mxu0 %v533
    %565 = vmatpush.bf16.msra.mxu0 %v532
    %566 = vmatmul.bf16.gmra.mxu0 %v535
    %v567 = vpop.f32.mrf.mxu0
    %v568 = vadd.f32 0.0, %v567
    %v569 = vpop.f32.mrf.mxu0
    %v570 = vadd.f32 0.0, %v569
    %571 = vmatmul.bf16.gmra.mxu0 %v538
    %v572 = vpop.f32.mrf.mxu0
    %v573 = vadd.f32 0.0, %v572
    %v574 = vpop.f32.mrf.mxu0
    %v575 = vadd.f32 0.0, %v574
    %576 = vmatmul.bf16.gmra.mxu0 %v541
    %v577 = vpop.f32.mrf.mxu0
    %v578 = vadd.f32 0.0, %v577
    %v579 = vpop.f32.mrf.mxu0
    %v580 = vadd.f32 0.0, %v579
    %581 = vmatmul.bf16.gmra.mxu0 %v544
    %v582 = vpop.f32.mrf.mxu0
    %v583 = vadd.f32 0.0, %v582
    %v584 = vpop.f32.mrf.mxu0
    %v585 = vadd.f32 0.0, %v584
    %586 = vmatmul.bf16.gmra.mxu0 %v547
    %v587 = vpop.f32.mrf.mxu0
    %v588 = vadd.f32 0.0, %v587
    %v589 = vpop.f32.mrf.mxu0
    %v590 = vadd.f32 0.0, %v589
    %591 = vmatmul.bf16.gmra.mxu0 %v550
    %v592 = vpop.f32.mrf.mxu0
    %v593 = vadd.f32 0.0, %v592
    %v594 = vpop.f32.mrf.mxu0
    %v595 = vadd.f32 0.0, %v594
    %596 = vmatmul.bf16.gmra.mxu0 %v553
    %v597 = vpop.f32.mrf.mxu0
    %v598 = vadd.f32 0.0, %v597
    %v599 = vpop.f32.mrf.mxu0
    %v600 = vadd.f32 0.0, %v599
    %601 = vmatmul.bf16.gmra.mxu0 %v556
    %v602 = vpop.f32.mrf.mxu0
    %v603 = vadd.f32 0.0, %v602
    %v604 = vpop.f32.mrf.mxu0
    %v605 = vadd.f32 0.0, %v604
    %606 = vdwg.mxu0
    %v607 = vmul.f32 %v568, %v210
    %v608 = vmul.f32 %v570, %v211
    %v609 = vmul.f32 %v573, %v212
    %v610 = vmul.f32 %v575, %v213
    %v611 = vmul.f32 %v578, %v214
    %v612 = vmul.f32 %v580, %v215
    %v613 = vmul.f32 %v583, %v216
    %v614 = vmul.f32 %v585, %v217
    %v615 = vmul.f32 %v588, %v218
    %v616 = vmul.f32 %v590, %v219
    %v617 = vmul.f32 %v593, %v220
    %v618 = vmul.f32 %v595, %v221
    %v619 = vmul.f32 %v598, %v222
    %v620 = vmul.f32 %v600, %v223
    %v621 = vmul.f32 %v603, %v224
    %v622 = vmul.f32 %v605, %v225
    %v623 = vadd.f32 %v607, %v611
    %v624 = vadd.f32 %v608, %v612
    %v625 = vadd.f32 %v609, %v613
    %v626 = vadd.f32 %v610, %v614
    %v627 = vadd.f32 %v623, %v615
    %v628 = vadd.f32 %v624, %v616
    %v629 = vadd.f32 %v625, %v617
    %v630 = vadd.f32 %v626, %v618
    %v631 = vadd.f32 %v627, %v619
    %v632 = vadd.f32 %v628, %v620
    %v633 = vadd.f32 %v629, %v621
    %v634 = vadd.f32 %v630, %v622
    %v635 = vpack.c.bf16 %v632, %v631
    %v636 = vpack.c.bf16 %v634, %v633
    %v637 = vperm.slane %v37, 3
    %v646 = vunpack.c.l.b16 %v63
    %v647 = vunpack.c.l.b16 %v64
    %v648 = vunpack.c.l.b16 %v65
    %v649 = vunpack.c.l.b16 %v66
    %v650 = vunpack.c.l.b16 %v67
    %v651 = vunpack.c.l.b16 %v68
    %v652 = vunpack.c.l.b16 %v69
    %v653 = vunpack.c.l.b16 %v70
    %v654 = vpack.c.b16 %v647, %v646
    %v655 = vpack.c.b16 %v649, %v648
    %v656 = vpack.c.b16 %v651, %v650
    %v657 = vpack.c.b16 %v653, %v652
    %v663 = vsel %vm96, %v635, 0
    %v666 = vsel %vm96, %v636, 0
    %668 = vmatpush.bf16.msra.mxu0 0
    %669 = vmatpush.bf16.msra.mxu0 0
    %670 = vmatpush.bf16.msra.mxu0 0
    %671 = vmatpush.bf16.msra.mxu0 0
    %672 = vmatpush.bf16.msra.mxu0 %v657
    %673 = vmatpush.bf16.msra.mxu0 %v656
    %674 = vmatpush.bf16.msra.mxu0 %v655
    %675 = vmatpush.bf16.msra.mxu0 %v654
    %676 = vmatmul.bf16.gmra.mxu0 %v663
    %v677 = vpop.f32.mrf.mxu0
    %v678 = vadd.f32 %v637, %v677
    %v679 = vpop.f32.mrf.mxu0
    %v680 = vadd.f32 %v637, %v679
    %681 = vmatmul.bf16.gmra.mxu0 %v666
    %v682 = vpop.f32.mrf.mxu0
    %v683 = vadd.f32 %v637, %v682
    %v684 = vpop.f32.mrf.mxu0
    %v685 = vadd.f32 %v637, %v684
    %686 = vdwg.mxu0
    %v687 = vadd.f32 %v31, %v678
    %v688 = vadd.f32 %v32, %v680
    %v689 = vadd.f32 %v33, %v683
    %v690 = vadd.f32 %v34, %v685
    %v691 = vsel %vm96, %v687, 0.0
    %692 = vadd.xlane.f32.xlu0 %v691
    %v693 = vpop.xlane.xlu0 %692
    %v694 = vsel %vm96, %v688, 0.0
    %695 = vadd.xlane.f32.xlu0 %v694
    %v696 = vpop.xlane.xlu0 %695
    %v697 = vsel %vm96, %v689, 0.0
    %698 = vadd.xlane.f32.xlu0 %v697
    %v699 = vpop.xlane.xlu0 %698
    %v700 = vsel %vm96, %v690, 0.0
    %701 = vadd.xlane.f32.xlu0 %v700
    %v702 = vpop.xlane.xlu0 %701
    %v703 = vrcp.pop 64.0
    %v704 = vmul.f32 64.0, %v703
    %v705 = vsub.f32 1.0, %v704
    %v706 = vmul.f32 %v703, %v705
    %v707 = vadd.f32 %v703, %v706
    %vm708 = vweird.f32 %v703
    %v709 = vsel %vm708, %v703, %v707
    %v710 = vmul.f32 %v693, %v709
    %v711 = vmul.f32 %v696, %v709
    %v712 = vmul.f32 %v699, %v709
    %v713 = vmul.f32 %v702, %v709
    %v714 = vmul.f32 %v687, %v687
    %v715 = vmul.f32 %v688, %v688
    %v716 = vmul.f32 %v689, %v689
    %v717 = vmul.f32 %v690, %v690
    %v718 = vsel %vm96, %v714, 0.0
    %719 = vadd.xlane.f32.xlu0 %v718
    %v720 = vpop.xlane.xlu0 %719
    %v721 = vsel %vm96, %v715, 0.0
    %722 = vadd.xlane.f32.xlu0 %v721
    %v723 = vpop.xlane.xlu0 %722
    %v724 = vsel %vm96, %v716, 0.0
    %725 = vadd.xlane.f32.xlu0 %v724
    %v726 = vpop.xlane.xlu0 %725
    %v727 = vsel %vm96, %v717, 0.0
    %728 = vadd.xlane.f32.xlu0 %v727
    %v729 = vpop.xlane.xlu0 %728
    %v730 = vmul.f32 %v720, %v709
    %v731 = vmul.f32 %v723, %v709
    %v732 = vmul.f32 %v726, %v709
    %v733 = vmul.f32 %v729, %v709
    %v734 = vmul.f32 %v710, %v710
    %v735 = vmul.f32 %v711, %v711
    %v736 = vmul.f32 %v712, %v712
    %v737 = vmul.f32 %v713, %v713
    %v738 = vsub.f32 %v730, %v734
    %v739 = vsub.f32 %v731, %v735
    %v740 = vsub.f32 %v732, %v736
    %v741 = vsub.f32 %v733, %v737
    %v742 = vsub.f32 %v687, %v710
    %v743 = vsub.f32 %v688, %v711
    %v744 = vsub.f32 %v689, %v712
    %v745 = vsub.f32 %v690, %v713
    %v746 = vadd.f32 %v738, 1e-12
    %v747 = vadd.f32 %v739, 1e-12
    %v748 = vadd.f32 %v740, 1e-12
    %v749 = vadd.f32 %v741, 1e-12
    %v750 = vrsqrt.pop %v746
    %v751 = vmul.f32 %v750, %v746
    %v752 = vmul.f32 %v751, %v750
    %v753 = vmul.f32 0.5, %v752
    %v754 = vsub.f32 1.5, %v753
    %v755 = vmul.f32 %v750, %v754
    %vm756 = vweird.f32 %v746
    %vm757 = vweird.f32 %v750
    %vm758 = vmor %vm756, %vm757
    %v759 = vsel %vm758, %v750, %v755
    %v760 = vrsqrt.pop %v747
    %v761 = vmul.f32 %v760, %v747
    %v762 = vmul.f32 %v761, %v760
    %v763 = vmul.f32 0.5, %v762
    %v764 = vsub.f32 1.5, %v763
    %v765 = vmul.f32 %v760, %v764
    %vm766 = vweird.f32 %v747
    %vm767 = vweird.f32 %v760
    %vm768 = vmor %vm766, %vm767
    %v769 = vsel %vm768, %v760, %v765
    %v770 = vrsqrt.pop %v748
    %v771 = vmul.f32 %v770, %v748
    %v772 = vmul.f32 %v771, %v770
    %v773 = vmul.f32 0.5, %v772
    %v774 = vsub.f32 1.5, %v773
    %v775 = vmul.f32 %v770, %v774
    %vm776 = vweird.f32 %v748
    %vm777 = vweird.f32 %v770
    %vm778 = vmor %vm776, %vm777
    %v779 = vsel %vm778, %v770, %v775
    %v780 = vrsqrt.pop %v749
    %v781 = vmul.f32 %v780, %v749
    %v782 = vmul.f32 %v781, %v780
    %v783 = vmul.f32 0.5, %v782
    %v784 = vsub.f32 1.5, %v783
    %v785 = vmul.f32 %v780, %v784
    %vm786 = vweird.f32 %v749
    %vm787 = vweird.f32 %v780
    %vm788 = vmor %vm786, %vm787
    %v789 = vsel %vm788, %v780, %v785
    %v790 = vmul.f32 %v742, %v759
    %v791 = vmul.f32 %v743, %v769
    %v792 = vmul.f32 %v744, %v779
    %v793 = vmul.f32 %v745, %v789
    %v794 = vperm.slane %v37, 4
    %v795 = vmul.f32 %v790, %v794
    %v796 = vmul.f32 %v791, %v794
    %v797 = vmul.f32 %v792, %v794
    %v798 = vmul.f32 %v793, %v794
    %v799 = vperm.slane %v37, 5
    %v800 = vadd.f32 %v795, %v799
    %v801 = vadd.f32 %v796, %v799
    %v802 = vadd.f32 %v797, %v799
    %v803 = vadd.f32 %v798, %v799
    %v804 = vpack.c.bf16 %v801, %v800
    %v805 = vpack.c.bf16 %v803, %v802
    %v806 = vld [vmem:[%s4] sm:$0xff]
    %v807 = vld [vmem:[%s4 + $0x8] sm:$0xff]
    %v808 = vld [vmem:[%s4 + $0x10] sm:$0xff]
    %v809 = vld [vmem:[%s4 + $0x18] sm:$0xff]
    %v810 = vld [vmem:[%s4 + $0x20] sm:$0xff]
    %v811 = vld [vmem:[%s4 + $0x28] sm:$0xff]
    %v812 = vld [vmem:[%s4 + $0x30] sm:$0xff]
    %v813 = vld [vmem:[%s4 + $0x38] sm:$0xff]
    %v814 = vld [vmem:[%s7] sm:$0x3]
    %v816 = vperm.slane %v814, 0
    %v817 = vperm.slane %v814, 1
    %v828 = vunpack.c.l.b16 %v806
    %v829 = vunpack.c.h.b16 %v806
    %v830 = vunpack.c.l.b16 %v807
    %v831 = vunpack.c.h.b16 %v807
    %v832 = vunpack.c.l.b16 %v808
    %v833 = vunpack.c.h.b16 %v808
    %v834 = vunpack.c.l.b16 %v809
    %v835 = vunpack.c.h.b16 %v809
    %v836 = vunpack.c.l.b16 %v810
    %v837 = vunpack.c.h.b16 %v810
    %v838 = vunpack.c.l.b16 %v811
    %v839 = vunpack.c.h.b16 %v811
    %v840 = vunpack.c.l.b16 %v812
    %v841 = vunpack.c.h.b16 %v812
    %v842 = vunpack.c.l.b16 %v813
    %v843 = vunpack.c.h.b16 %v813
    %v844 = vpack.c.b16 %v830, %v828
    %v845 = vpack.c.b16 %v831, %v829
    %v846 = vpack.c.b16 %v834, %v832
    %v847 = vpack.c.b16 %v835, %v833
    %v848 = vpack.c.b16 %v838, %v836
    %v849 = vpack.c.b16 %v839, %v837
    %v850 = vpack.c.b16 %v842, %v840
    %v851 = vpack.c.b16 %v843, %v841
    %v861 = vsel %vm96, %v804, 0
    %v864 = vsel %vm96, %v805, 0
    %866 = vmatpush.bf16.msra.mxu0 0
    %867 = vmatpush.bf16.msra.mxu0 0
    %868 = vmatpush.bf16.msra.mxu0 0
    %869 = vmatpush.bf16.msra.mxu0 0
    %870 = vmatpush.bf16.msra.mxu0 %v850
    %871 = vmatpush.bf16.msra.mxu0 %v848
    %872 = vmatpush.bf16.msra.mxu0 %v846
    %873 = vmatpush.bf16.msra.mxu0 %v844
    %874 = vmatmul.bf16.gmra.mxu0 %v861
    %v875 = vpop.f32.mrf.mxu0
    %v876 = vadd.f32 %v816, %v875
    %v877 = vpop.f32.mrf.mxu0
    %v878 = vadd.f32 %v816, %v877
    %879 = vmatmul.bf16.gmra.mxu0 %v864
    %v880 = vpop.f32.mrf.mxu0
    %v881 = vadd.f32 %v816, %v880
    %v882 = vpop.f32.mrf.mxu0
    %v883 = vadd.f32 %v816, %v882
    %884 = vdwg.mxu0
    %885 = vmatpush.bf16.msra.mxu0 0
    %886 = vmatpush.bf16.msra.mxu0 0
    %887 = vmatpush.bf16.msra.mxu0 0
    %888 = vmatpush.bf16.msra.mxu0 0
    %889 = vmatpush.bf16.msra.mxu0 %v851
    %890 = vmatpush.bf16.msra.mxu0 %v849
    %891 = vmatpush.bf16.msra.mxu0 %v847
    %892 = vmatpush.bf16.msra.mxu0 %v845
    %893 = vmatmul.bf16.gmra.mxu0 %v861
    %v894 = vpop.f32.mrf.mxu0
    %v895 = vadd.f32 %v817, %v894
    %v896 = vpop.f32.mrf.mxu0
    %v897 = vadd.f32 %v817, %v896
    %898 = vmatmul.bf16.gmra.mxu0 %v864
    %v899 = vpop.f32.mrf.mxu0
    %v900 = vadd.f32 %v817, %v899
    %v901 = vpop.f32.mrf.mxu0
    %v902 = vadd.f32 %v817, %v901
    %903 = vdwg.mxu0
    %v904 = vmul.f32 %v876, %v876
    %v905 = vmul.f32 %v895, %v895
    %v906 = vmul.f32 %v878, %v878
    %v907 = vmul.f32 %v897, %v897
    %v908 = vmul.f32 %v881, %v881
    %v909 = vmul.f32 %v900, %v900
    %v910 = vmul.f32 %v883, %v883
    %v911 = vmul.f32 %v902, %v902
    %v912 = vmul.f32 %v876, %v904
    %v913 = vmul.f32 %v895, %v905
    %v914 = vmul.f32 %v878, %v906
    %v915 = vmul.f32 %v897, %v907
    %v916 = vmul.f32 %v881, %v908
    %v917 = vmul.f32 %v900, %v909
    %v918 = vmul.f32 %v883, %v910
    %v919 = vmul.f32 %v902, %v911
    %v920 = vmul.f32 %v912, 0.044715
    %v921 = vmul.f32 %v913, 0.044715
    %v922 = vmul.f32 %v914, 0.044715
    %v923 = vmul.f32 %v915, 0.044715
    %v924 = vmul.f32 %v916, 0.044715
    %v925 = vmul.f32 %v917, 0.044715
    %v926 = vmul.f32 %v918, 0.044715
    %v927 = vmul.f32 %v919, 0.044715
    %v928 = vadd.f32 %v876, %v920
    %v929 = vadd.f32 %v895, %v921
    %v930 = vadd.f32 %v878, %v922
    %v931 = vadd.f32 %v897, %v923
    %v932 = vadd.f32 %v881, %v924
    %v933 = vadd.f32 %v900, %v925
    %v934 = vadd.f32 %v883, %v926
    %v935 = vadd.f32 %v902, %v927
    %v936 = vmul.f32 %v928, 0.7978846
    %v937 = vmul.f32 %v929, 0.7978846
    %v938 = vmul.f32 %v930, 0.7978846
    %v939 = vmul.f32 %v931, 0.7978846
    %v940 = vmul.f32 %v932, 0.7978846
    %v941 = vmul.f32 %v933, 0.7978846
    %v942 = vmul.f32 %v934, 0.7978846
    %v943 = vmul.f32 %v935, 0.7978846
    %v944 = vtanh.pop %v936
    %v945 = vtanh.pop %v937
    %v946 = vtanh.pop %v938
    %v947 = vtanh.pop %v939
    %v948 = vtanh.pop %v940
    %v949 = vtanh.pop %v941
    %v950 = vtanh.pop %v942
    %v951 = vtanh.pop %v943
    %v952 = vadd.f32 %v944, 1.0
    %v953 = vadd.f32 %v945, 1.0
    %v954 = vadd.f32 %v946, 1.0
    %v955 = vadd.f32 %v947, 1.0
    %v956 = vadd.f32 %v948, 1.0
    %v957 = vadd.f32 %v949, 1.0
    %v958 = vadd.f32 %v950, 1.0
    %v959 = vadd.f32 %v951, 1.0
    %v960 = vmul.f32 %v952, 0.5
    %v961 = vmul.f32 %v953, 0.5
    %v962 = vmul.f32 %v954, 0.5
    %v963 = vmul.f32 %v955, 0.5
    %v964 = vmul.f32 %v956, 0.5
    %v965 = vmul.f32 %v957, 0.5
    %v966 = vmul.f32 %v958, 0.5
    %v967 = vmul.f32 %v959, 0.5
    %v968 = vmul.f32 %v876, %v960
    %v969 = vmul.f32 %v895, %v961
    %v970 = vmul.f32 %v878, %v962
    %v971 = vmul.f32 %v897, %v963
    %v972 = vmul.f32 %v881, %v964
    %v973 = vmul.f32 %v900, %v965
    %v974 = vmul.f32 %v883, %v966
    %v975 = vmul.f32 %v902, %v967
    %v976 = vpack.c.bf16 %v970, %v968
    %v977 = vpack.c.bf16 %v971, %v969
    %v978 = vpack.c.bf16 %v974, %v972
    %v979 = vpack.c.bf16 %v975, %v973
    %v980 = vld [vmem:[%s5] sm:$0xf]
    %v981 = vld [vmem:[%s5 + $0x4] sm:$0xf]
    %v982 = vld [vmem:[%s5 + $0x8] sm:$0xf]
    %v983 = vld [vmem:[%s5 + $0xc] sm:$0xf]
    %v984 = vld [vmem:[%s5 + $0x10] sm:$0xf]
    %v985 = vld [vmem:[%s5 + $0x14] sm:$0xf]
    %v986 = vld [vmem:[%s5 + $0x18] sm:$0xf]
    %v987 = vld [vmem:[%s5 + $0x1c] sm:$0xf]
    %v988 = vld [vmem:[%s5 + $0x20] sm:$0xf]
    %v989 = vld [vmem:[%s5 + $0x24] sm:$0xf]
    %v990 = vld [vmem:[%s5 + $0x28] sm:$0xf]
    %v991 = vld [vmem:[%s5 + $0x2c] sm:$0xf]
    %v992 = vld [vmem:[%s5 + $0x30] sm:$0xf]
    %v993 = vld [vmem:[%s5 + $0x34] sm:$0xf]
    %v994 = vld [vmem:[%s5 + $0x38] sm:$0xf]
    %v995 = vld [vmem:[%s5 + $0x3c] sm:$0xf]
    %v996 = vld [vmem:[%s5 + $0x40] sm:$0xf]
    %v997 = vld [vmem:[%s5 + $0x44] sm:$0xf]
    %v998 = vld [vmem:[%s5 + $0x48] sm:$0xf]
    %v999 = vld [vmem:[%s5 + $0x4c] sm:$0xf]
    %v1000 = vld [vmem:[%s5 + $0x50] sm:$0xf]
    %v1001 = vld [vmem:[%s5 + $0x54] sm:$0xf]
    %v1002 = vld [vmem:[%s5 + $0x58] sm:$0xf]
    %v1003 = vld [vmem:[%s5 + $0x5c] sm:$0xf]
    %v1004 = vld [vmem:[%s5 + $0x60] sm:$0xf]
    %v1005 = vld [vmem:[%s5 + $0x64] sm:$0xf]
    %v1006 = vld [vmem:[%s5 + $0x68] sm:$0xf]
    %v1007 = vld [vmem:[%s5 + $0x6c] sm:$0xf]
    %v1008 = vld [vmem:[%s5 + $0x70] sm:$0xf]
    %v1009 = vld [vmem:[%s5 + $0x74] sm:$0xf]
    %v1010 = vld [vmem:[%s5 + $0x78] sm:$0xf]
    %v1011 = vld [vmem:[%s5 + $0x7c] sm:$0xf]
    %v1012 = vperm.slane %v37, 6
    %v1045 = vunpack.c.l.b16 %v980
    %v1046 = vunpack.c.l.b16 %v981
    %v1047 = vunpack.c.l.b16 %v982
    %v1048 = vunpack.c.l.b16 %v983
    %v1049 = vunpack.c.l.b16 %v984
    %v1050 = vunpack.c.l.b16 %v985
    %v1051 = vunpack.c.l.b16 %v986
    %v1052 = vunpack.c.l.b16 %v987
    %v1053 = vunpack.c.l.b16 %v988
    %v1054 = vunpack.c.l.b16 %v989
    %v1055 = vunpack.c.l.b16 %v990
    %v1056 = vunpack.c.l.b16 %v991
    %v1057 = vunpack.c.l.b16 %v992
    %v1058 = vunpack.c.l.b16 %v993
    %v1059 = vunpack.c.l.b16 %v994
    %v1060 = vunpack.c.l.b16 %v995
    %v1061 = vunpack.c.l.b16 %v996
    %v1062 = vunpack.c.l.b16 %v997
    %v1063 = vunpack.c.l.b16 %v998
    %v1064 = vunpack.c.l.b16 %v999
    %v1065 = vunpack.c.l.b16 %v1000
    %v1066 = vunpack.c.l.b16 %v1001
    %v1067 = vunpack.c.l.b16 %v1002
    %v1068 = vunpack.c.l.b16 %v1003
    %v1069 = vunpack.c.l.b16 %v1004
    %v1070 = vunpack.c.l.b16 %v1005
    %v1071 = vunpack.c.l.b16 %v1006
    %v1072 = vunpack.c.l.b16 %v1007
    %v1073 = vunpack.c.l.b16 %v1008
    %v1074 = vunpack.c.l.b16 %v1009
    %v1075 = vunpack.c.l.b16 %v1010
    %v1076 = vunpack.c.l.b16 %v1011
    %v1077 = vpack.c.b16 %v1046, %v1045
    %v1078 = vpack.c.b16 %v1048, %v1047
    %v1079 = vpack.c.b16 %v1050, %v1049
    %v1080 = vpack.c.b16 %v1052, %v1051
    %v1081 = vpack.c.b16 %v1054, %v1053
    %v1082 = vpack.c.b16 %v1056, %v1055
    %v1083 = vpack.c.b16 %v1058, %v1057
    %v1084 = vpack.c.b16 %v1060, %v1059
    %v1085 = vpack.c.b16 %v1062, %v1061
    %v1086 = vpack.c.b16 %v1064, %v1063
    %v1087 = vpack.c.b16 %v1066, %v1065
    %v1088 = vpack.c.b16 %v1068, %v1067
    %v1089 = vpack.c.b16 %v1070, %v1069
    %v1090 = vpack.c.b16 %v1072, %v1071
    %v1091 = vpack.c.b16 %v1074, %v1073
    %v1092 = vpack.c.b16 %v1076, %v1075
    %1109 = vmatpush.bf16.msra.mxu0 %v1084
    %1110 = vmatpush.bf16.msra.mxu0 %v1083
    %1111 = vmatpush.bf16.msra.mxu0 %v1082
    %1112 = vmatpush.bf16.msra.mxu0 %v1081
    %1113 = vmatpush.bf16.msra.mxu0 %v1080
    %1114 = vmatpush.bf16.msra.mxu0 %v1079
    %1115 = vmatpush.bf16.msra.mxu0 %v1078
    %1116 = vmatpush.bf16.msra.mxu0 %v1077
    %1117 = vmatmul.bf16.gmra.mxu0 %v976
    %v1118 = vpop.f32.mrf.mxu0
    %v1119 = vadd.f32 %v1012, %v1118
    %v1120 = vpop.f32.mrf.mxu0
    %v1121 = vadd.f32 %v1012, %v1120
    %1122 = vmatmul.bf16.gmra.mxu0 %v978
    %v1123 = vpop.f32.mrf.mxu0
    %v1124 = vadd.f32 %v1012, %v1123
    %v1125 = vpop.f32.mrf.mxu0
    %v1126 = vadd.f32 %v1012, %v1125
    %1127 = vdwg.mxu0
    %1128 = vmatpush.bf16.msra.mxu0 %v1092
    %1129 = vmatpush.bf16.msra.mxu0 %v1091
    %1130 = vmatpush.bf16.msra.mxu0 %v1090
    %1131 = vmatpush.bf16.msra.mxu0 %v1089
    %1132 = vmatpush.bf16.msra.mxu0 %v1088
    %1133 = vmatpush.bf16.msra.mxu0 %v1087
    %1134 = vmatpush.bf16.msra.mxu0 %v1086
    %1135 = vmatpush.bf16.msra.mxu0 %v1085
    %1136 = vmatmul.bf16.gmra.mxu0 %v977
    %v1137 = vpop.f32.mrf.mxu0
    %v1138 = vadd.f32 %v1119, %v1137
    %v1139 = vpop.f32.mrf.mxu0
    %v1140 = vadd.f32 %v1121, %v1139
    %1141 = vmatmul.bf16.gmra.mxu0 %v979
    %v1142 = vpop.f32.mrf.mxu0
    %v1143 = vadd.f32 %v1124, %v1142
    %v1144 = vpop.f32.mrf.mxu0
    %v1145 = vadd.f32 %v1126, %v1144
    %1146 = vdwg.mxu0
    %v1147 = vadd.f32 %v800, %v1138
    %v1148 = vadd.f32 %v801, %v1140
    %v1149 = vadd.f32 %v802, %v1143
    %v1150 = vadd.f32 %v803, %v1145
    %v1151 = vsel %vm96, %v1147, 0.0
    %1152 = vadd.xlane.f32.xlu0 %v1151
    %v1153 = vpop.xlane.xlu0 %1152
    %v1154 = vsel %vm96, %v1148, 0.0
    %1155 = vadd.xlane.f32.xlu0 %v1154
    %v1156 = vpop.xlane.xlu0 %1155
    %v1157 = vsel %vm96, %v1149, 0.0
    %1158 = vadd.xlane.f32.xlu0 %v1157
    %v1159 = vpop.xlane.xlu0 %1158
    %v1160 = vsel %vm96, %v1150, 0.0
    %1161 = vadd.xlane.f32.xlu0 %v1160
    %v1162 = vpop.xlane.xlu0 %1161
    %v1163 = vmul.f32 %v1153, %v709
    %v1164 = vmul.f32 %v1156, %v709
    %v1165 = vmul.f32 %v1159, %v709
    %v1166 = vmul.f32 %v1162, %v709
    %v1167 = vmul.f32 %v1147, %v1147
    %v1168 = vmul.f32 %v1148, %v1148
    %v1169 = vmul.f32 %v1149, %v1149
    %v1170 = vmul.f32 %v1150, %v1150
    %v1171 = vsel %vm96, %v1167, 0.0
    %1172 = vadd.xlane.f32.xlu0 %v1171
    %v1173 = vpop.xlane.xlu0 %1172
    %v1174 = vsel %vm96, %v1168, 0.0
    %1175 = vadd.xlane.f32.xlu0 %v1174
    %v1176 = vpop.xlane.xlu0 %1175
    %v1177 = vsel %vm96, %v1169, 0.0
    %1178 = vadd.xlane.f32.xlu0 %v1177
    %v1179 = vpop.xlane.xlu0 %1178
    %v1180 = vsel %vm96, %v1170, 0.0
    %1181 = vadd.xlane.f32.xlu0 %v1180
    %v1182 = vpop.xlane.xlu0 %1181
    %v1183 = vmul.f32 %v1173, %v709
    %v1184 = vmul.f32 %v1176, %v709
    %v1185 = vmul.f32 %v1179, %v709
    %v1186 = vmul.f32 %v1182, %v709
    %v1187 = vmul.f32 %v1163, %v1163
    %v1188 = vmul.f32 %v1164, %v1164
    %v1189 = vmul.f32 %v1165, %v1165
    %v1190 = vmul.f32 %v1166, %v1166
    %v1191 = vsub.f32 %v1183, %v1187
    %v1192 = vsub.f32 %v1184, %v1188
    %v1193 = vsub.f32 %v1185, %v1189
    %v1194 = vsub.f32 %v1186, %v1190
    %v1195 = vsub.f32 %v1147, %v1163
    %v1196 = vsub.f32 %v1148, %v1164
    %v1197 = vsub.f32 %v1149, %v1165
    %v1198 = vsub.f32 %v1150, %v1166
    %v1199 = vadd.f32 %v1191, 1e-12
    %v1200 = vadd.f32 %v1192, 1e-12
    %v1201 = vadd.f32 %v1193, 1e-12
    %v1202 = vadd.f32 %v1194, 1e-12
    %v1203 = vrsqrt.pop %v1199
    %v1204 = vmul.f32 %v1203, %v1199
    %v1205 = vmul.f32 %v1204, %v1203
    %v1206 = vmul.f32 0.5, %v1205
    %v1207 = vsub.f32 1.5, %v1206
    %v1208 = vmul.f32 %v1203, %v1207
    %vm1209 = vweird.f32 %v1199
    %vm1210 = vweird.f32 %v1203
    %vm1211 = vmor %vm1209, %vm1210
    %v1212 = vsel %vm1211, %v1203, %v1208
    %v1213 = vrsqrt.pop %v1200
    %v1214 = vmul.f32 %v1213, %v1200
    %v1215 = vmul.f32 %v1214, %v1213
    %v1216 = vmul.f32 0.5, %v1215
    %v1217 = vsub.f32 1.5, %v1216
    %v1218 = vmul.f32 %v1213, %v1217
    %vm1219 = vweird.f32 %v1200
    %vm1220 = vweird.f32 %v1213
    %vm1221 = vmor %vm1219, %vm1220
    %v1222 = vsel %vm1221, %v1213, %v1218
    %v1223 = vrsqrt.pop %v1201
    %v1224 = vmul.f32 %v1223, %v1201
    %v1225 = vmul.f32 %v1224, %v1223
    %v1226 = vmul.f32 0.5, %v1225
    %v1227 = vsub.f32 1.5, %v1226
    %v1228 = vmul.f32 %v1223, %v1227
    %vm1229 = vweird.f32 %v1201
    %vm1230 = vweird.f32 %v1223
    %vm1231 = vmor %vm1229, %vm1230
    %v1232 = vsel %vm1231, %v1223, %v1228
    %v1233 = vrsqrt.pop %v1202
    %v1234 = vmul.f32 %v1233, %v1202
    %v1235 = vmul.f32 %v1234, %v1233
    %v1236 = vmul.f32 0.5, %v1235
    %v1237 = vsub.f32 1.5, %v1236
    %v1238 = vmul.f32 %v1233, %v1237
    %vm1239 = vweird.f32 %v1202
    %vm1240 = vweird.f32 %v1233
    %vm1241 = vmor %vm1239, %vm1240
    %v1242 = vsel %vm1241, %v1233, %v1238
    %v1243 = vmul.f32 %v1195, %v1212
    %v1244 = vmul.f32 %v1196, %v1222
    %v1245 = vmul.f32 %v1197, %v1232
    %v1246 = vmul.f32 %v1198, %v1242
    %v1247 = vperm.slane %v37, 7
    %v1248 = vmul.f32 %v1243, %v1247
    %v1249 = vmul.f32 %v1244, %v1247
    %v1250 = vmul.f32 %v1245, %v1247
    %v1251 = vmul.f32 %v1246, %v1247
    %v1252 = vperm.slane %v38, 0
    %v1253 = vadd.f32 %v1248, %v1252
    %v1254 = vadd.f32 %v1249, %v1252
    %v1255 = vadd.f32 %v1250, %v1252
    %v1256 = vadd.f32 %v1251, %v1252
    %1257 = vst.msk [vmem:[#allocation2] sm:$0xff] %vm96, %v1253
    %1258 = vst.msk [vmem:[#allocation2 + $0x8] sm:$0xff] %vm96, %v1254
    %1259 = vst.msk [vmem:[#allocation2 + $0x10] sm:$0xff] %vm96, %v1255
    %1260 = vst.msk [vmem:[#allocation2 + $0x18] sm:$0xff] %vm96, %v1256
    // Predicated region
    $region34: #{bert_layer_pallas.1} parent=1 // pred_check
      _
    $region35: #{bert_layer_pallas.1} parent=1 // pred_check_branch
      %1262 = sbr.rel (0) target = $region37
    $region36: #{bert_layer_pallas.1} parent=1 // pred_region
      %1264 = vsyncadd [#allocation3], 0
      %s1265 = sshll.u32 [#allocation2], 4
      %s1266 = int_to_ptr.vmem [resolvable:$true] %s1265
      %s1267 = sshll.u32 %s8, 4
      %s1268 = int_to_ptr.hbm [resolvable:$true] %s1267
      %1273 = dma.vmem_to_hbm [thread:$0]  %s1266, 512, %s1268, [#allocation3], 128, 128, 8
    $region37: #{bert_layer_pallas.1} parent=1 // pred_fallthru
      _
    // Predicated region
    $region38: #{bert_layer_pallas.1} parent=1 // pred_check
      _
    $region39: #{bert_layer_pallas.1} parent=1 // pred_check_branch
      %1275 = sbr.rel (0) target = $region41
    $region40: #{bert_layer_pallas.1} parent=1 // pred_region
      %1277 = dma.done [#allocation3], 512
    $region41: #{bert_layer_pallas.1} parent=1 // pred_fallthru
      _
    %1278 = vsyncpa [#allocation3], 1

</llo_original>
